<compile_context>
chip_gen: v5e
topology: v5e:2x2
jax: 0.10.0
libtpu: 0.0.40
codegen_flags: <defaults>
</compile_context>

<pallas_src>
import functools

import numpy as np

import jax
import jax.numpy as jnp
from jax import lax
from jax.experimental import pallas as pl
from jax.experimental.pallas import tpu as pltpu


# -----------------------------------------------------------------------------
# Fused kernel: conv1(3x3,pad1)+ReLU+pool2 -> conv2(3x3,pad1)+ReLU+pool2
# Per grid step: `bt` images.  All channel dims padded to 128 (lane-dense).
# -----------------------------------------------------------------------------
def _cnn_fused_kernel(p1_ref, w1_ref, b1_ref, s1_ref, w2_ref, b2_ref, s2_ref,
                      o_ref, h1p_ref, *, bt):
    # p1_ref : (1, bt*784, 9*Cin)  im2col patches, strip-major then image-major
    # w1_ref : (9*Cin, 128)        conv1 weight, Cout padded 32->128
    # b1_ref : (1, 128)
    # s1_ref : (128, 112)          4 stacked pool phase-selection matrices (L1)
    # w2_ref : (1152, 128)         conv2 weight, 9 taps stacked along K
    # b2_ref : (1, 128)
    # s2_ref : (32, 32)            4 stacked pool phase-selection matrices (L2)
    # o_ref  : (bt, 56, 128)       pooled conv2 output, rows t*8+w (w<7)
    # h1p_ref: (bt, 264, 128) VMEM zero-padded 16x16 h1 plane per image
    f32 = jnp.float32

    # Zero the top/bottom spatial-padding rows (+ slack) of every h1 plane.
    # Re-done every step so grid steps stay independent ("parallel" safe).
    h1p_ref[:, 0:16, :] = jnp.zeros((bt, 16, 128), f32)
    h1p_ref[:, 240:264, :] = jnp.zeros((bt, 24, 128), f32)

    # ------------- layer 1: 7 strips of 4 conv rows, all bt images at once ---
    def layer1_strip(s, carry):
        row0 = pl.multiple_of(s * (bt * 112), 16)
        patch = p1_ref[0, pl.ds(row0, bt * 112), :]                # (bt*112, 9Cin)
        y = jnp.dot(patch, w1_ref[...], preferred_element_type=f32)
        y = jnp.maximum(y + b1_ref[...], 0.0)                      # (bt*112, 128)
        dst0 = pl.multiple_of((2 * s + 1) * 16, 16)
        s1 = s1_ref[...]                                           # (128, 112)
        for b in range(bt):
            yb = y[b * 112:(b + 1) * 112, :]                       # (112, 128)
            ph = jnp.dot(s1, yb, preferred_element_type=f32)       # (128, 128)
            blk = jnp.max(ph.reshape(4, 32, 128), axis=0)          # (32, 128)
            # pooled rows 2s, 2s+1 -> padded-plane rows 2s+1, 2s+2 (aligned)
            h1p_ref[b, pl.ds(dst0, 32), :] = blk
        return carry

    lax.fori_loop(0, 7, layer1_strip, 0)

    # ------------- layer 2: 7 strips of 2 conv rows, single K=1152 matmul ----
    def layer2_strip(t, carry):
        base = t * 32
        lhs_parts = []
        for b in range(bt):
            taps = []
            for ky in range(3):
                src0 = pl.multiple_of(base + ky * 16, 16)
                slab = h1p_ref[b, pl.ds(src0, 40), :]              # aligned (40,128)
                for kx in range(3):
                    taps.append(slab[kx:kx + 32, :])               # in-reg shift
            lhs_parts.append(jnp.concatenate(taps, axis=1))        # (32, 1152)
        lhs = jnp.concatenate(lhs_parts, axis=0) if bt > 1 else lhs_parts[0]
        acc = jnp.dot(lhs, w2_ref[...], preferred_element_type=f32)  # (bt*32,128)
        acc = jnp.maximum(acc + b2_ref[...], 0.0)
        out0 = pl.multiple_of(t * 8, 8)
        s2 = s2_ref[...]                                           # (32, 32)
        for b in range(bt):
            ab = acc[b * 32:(b + 1) * 32, :]                       # (32, 128)
            ph = jnp.dot(s2, ab, preferred_element_type=f32)       # (32, 128)
            pooled = jnp.max(ph.reshape(4, 8, 128), axis=0)        # (8, 128)
            o_ref[b, pl.ds(out0, 8), :] = pooled
        return carry

    lax.fori_loop(0, 7, layer2_strip, 0)


def cnn_fused_conv(p1, w1m, b1p, s1s, w2f, b2p, s2s, *, bt):
    nb, rows, k1 = p1.shape
    assert rows == bt * 784
    kernel = functools.partial(_cnn_fused_kernel, bt=bt)
    return pl.pallas_call(
        kernel,
        out_shape=jax.ShapeDtypeStruct((nb * bt, 56, 128), jnp.float32),
        grid_spec=pltpu.PrefetchScalarGridSpec(
            num_scalar_prefetch=0,
            grid=(nb,),
            in_specs=[
                pl.BlockSpec((1, rows, k1), lambda b: (b, 0, 0)),
                pl.BlockSpec(w1m.shape, lambda b: (0, 0)),
                pl.BlockSpec(b1p.shape, lambda b: (0, 0)),
                pl.BlockSpec(s1s.shape, lambda b: (0, 0)),
                pl.BlockSpec(w2f.shape, lambda b: (0, 0)),
                pl.BlockSpec(b2p.shape, lambda b: (0, 0)),
                pl.BlockSpec(s2s.shape, lambda b: (0, 0)),
            ],
            out_specs=pl.BlockSpec((bt, 56, 128), lambda b: (b, 0, 0)),
            scratch_shapes=[pltpu.VMEM((bt, 264, 128), jnp.float32)],
        ),
        compiler_params=pltpu.CompilerParams(
            dimension_semantics=("parallel",)),
    )(p1, w1m, b1p, s1s, w2f, b2p, s2s)


# -----------------------------------------------------------------------------
# Fully-connected layer: x @ W + b  (N padded to 128, weight resident in VMEM)
# -----------------------------------------------------------------------------
def _linear_kernel(x_ref, w_ref, b_ref, o_ref):
    o_ref[...] = (jnp.dot(x_ref[...], w_ref[...],
                          preferred_element_type=jnp.float32) + b_ref[...])


def linear(x, w, b):
    B, K = x.shape
    N = w.shape[1]
    bm = B if B <= 256 else 256
    return pl.pallas_call(
        _linear_kernel,
        out_shape=jax.ShapeDtypeStruct((B, N), jnp.float32),
        grid_spec=pltpu.PrefetchScalarGridSpec(
            num_scalar_prefetch=0,
            grid=(pl.cdiv(B, bm),),
            in_specs=[pl.BlockSpec((bm, K), lambda i: (i, 0)),
                      pl.BlockSpec(w.shape, lambda i: (0, 0)),
                      pl.BlockSpec(b.shape, lambda i: (0, 0))],
            out_specs=pl.BlockSpec((bm, N), lambda i: (i, 0)),
        ),
        compiler_params=pltpu.CompilerParams(
            dimension_semantics=("parallel",)),
    )(x, w, b)


# -----------------------------------------------------------------------------
# One-time weight preprocessing (hoisted out of the forward pass)
# -----------------------------------------------------------------------------
def prepare_params(params):
    f32 = jnp.float32
    cin = params["conv1_w"].shape[1]
    out_ch = params["fc_w"].shape[0]

    # conv1: (32, Cin, 3, 3) -> (3,3,Cin,32) -> (9*Cin, 32) -> pad Cout to 128
    w1 = jnp.transpose(params["conv1_w"], (2, 3, 1, 0)).reshape(9 * cin, 32)
    w1m = jnp.pad(w1, ((0, 0), (0, 96))).astype(f32)
    b1p = jnp.pad(params["conv1_b"], (0, 96)).reshape(1, 128).astype(f32)

    # conv2: (64, 32, 3, 3) -> (3,3,32,64) -> pad Cin 32->128, Cout 64->128,
    # then stack the 9 taps along K -> (1152, 128) for a single K-merged matmul.
    w2 = jnp.transpose(params["conv2_w"], (2, 3, 1, 0))
    w2m = jnp.pad(w2, ((0, 0), (0, 0), (0, 96), (0, 64)))
    w2f = w2m.reshape(9 * 128, 128).astype(f32)
    b2p = jnp.pad(params["conv2_b"], (0, 64)).reshape(1, 128).astype(f32)

    # fc: torch flattens (c, h, w); kernel flatten is ((h*8 + w)*128 + c).
    wf = params["fc_w"].reshape(out_ch, 64, 7, 7)          # (n, c, h, w)
    wf = jnp.transpose(wf, (2, 3, 1, 0))                   # (h, w, c, n)
    wf = jnp.pad(wf, ((0, 0), (0, 1), (0, 64), (0, 128 - out_ch)))  # (7,8,128,128)
    wf_eff = wf.reshape(7 * 8 * 128, 128).astype(f32)
    bf_eff = jnp.pad(params["fc_b"], (0, 128 - out_ch)).reshape(1, 128).astype(f32)

    # Exact 0/1 phase-selection matrices for the 2x2 max pools, stacked over
    # the 4 phases (one matmul per pool, then a free reshape + VPU max).
    # Layer 1: strip rows r = h_local*28 + w; output row q = j*16 + 1 + w2
    #          (the +1 / row 15 columns place the zero pad for conv2's input).
    s1 = np.zeros((4, 32, 112), np.float32)
    # Layer 2: strip rows r = dy*16 + x (x<14 valid); pooled row = w2.
    s2 = np.zeros((4, 8, 32), np.float32)
    for p, (dy, dx) in enumerate(((0, 0), (0, 1), (1, 0), (1, 1))):
        for j in range(2):
            for w2c in range(14):
                s1[p, j * 16 + 1 + w2c, (2 * j + dy) * 28 + 2 * w2c + dx] = 1.0
        for w2c in range(7):
            s2[p, w2c, dy * 16 + 2 * w2c + dx] = 1.0
    s1s = jnp.asarray(s1.reshape(4 * 32, 112))
    s2s = jnp.asarray(s2.reshape(4 * 8, 32))

    return dict(w1m=w1m, b1p=b1p, s1=s1s, w2f=w2f, b2p=b2p, s2=s2s,
                wf=wf_eff, bf=bf_eff, out_ch=out_ch, cin=cin)


# -----------------------------------------------------------------------------
# Full forward pass (matches torch CNN.forward, given the same weights)
# -----------------------------------------------------------------------------
def cnn_forward(x_nchw, prep, block_batch=None):
    B, cin, H, W = x_nchw.shape
    assert (H, W) == (28, 28) and cin == prep["cin"]
    if block_batch is None:
        # Fill the MXU M dim without collapsing the grid to a single step
        # (keeps both v7x TCs busy) and without blowing v5e's VMEM default.
        block_batch = min(8, max(1, B // 2))
    bt = max(1, min(block_batch, 8))
    nb = pl.cdiv(B, bt)
    bp = nb * bt
    k1 = 9 * cin

    # NCHW -> NHWC, pad batch to bt multiple, pad spatial, im2col (9 shifts).
    x = jnp.transpose(x_nchw, (0, 2, 3, 1)).astype(jnp.float32)    # (B,28,28,Cin)
    if bp != B:
        x = jnp.pad(x, ((0, bp - B), (0, 0), (0, 0), (0, 0)))
    xp = jnp.pad(x, ((0, 0), (1, 1), (1, 1), (0, 0)))              # (bp,30,30,Cin)
    patches = jnp.concatenate(
        [xp[:, ky:ky + 28, kx:kx + 28, :] for ky in range(3) for kx in range(3)],
        axis=-1)                                                    # (bp,28,28,9Cin)
    # Group bt images per grid step, interleaving them inside each 4-row strip
    # so the kernel's strip read is one contiguous (bt*112, 9Cin) slab.
    p1 = patches.reshape(nb, bt, 7, 112, k1)
    p1 = jnp.transpose(p1, (0, 2, 1, 3, 4)).reshape(nb, bt * 784, k1)

    h2 = cnn_fused_conv(p1, prep["w1m"], prep["b1p"], prep["s1"],
                        prep["w2f"], prep["b2p"], prep["s2"], bt=bt)  # (bp,56,128)
    feat = h2.reshape(bp, 56 * 128)
    out = linear(feat, prep["wf"], prep["bf"])                      # (bp,128)
    return out[:B, :prep["out_ch"]]


# -----------------------------------------------------------------------------
# Deterministic synthetic parameters (shapes from the torch module __init__)
# -----------------------------------------------------------------------------
def init_params(key, in_ch, out_ch):
    ks = jax.random.split(key, 6)

    def unif(k, shape, fan_in):
        bound = 1.0 / float(fan_in) ** 0.5
        return jax.random.uniform(k, shape, jnp.float32, -bound, bound)

    p = {}
    p["conv1_w"] = unif(ks[0], (32, in_ch, 3, 3), in_ch * 9)
    p["conv1_b"] = unif(ks[1], (32,), in_ch * 9)
    p["conv2_w"] = unif(ks[2], (64, 32, 3, 3), 32 * 9)
    p["conv2_b"] = unif(ks[3], (64,), 32 * 9)
    fan_in, fan_out = 7 * 7 * 64, out_ch
    xav = (6.0 / (fan_in + fan_out)) ** 0.5                 # xavier_uniform_
    p["fc_w"] = jax.random.uniform(ks[4], (out_ch, fan_in), jnp.float32, -xav, xav)
    p["fc_b"] = unif(ks[5], (out_ch,), fan_in)
    return p


# -----------------------------------------------------------------------------
# Pure-JAX reference (same math via XLA ops) for correctness checking.
# -----------------------------------------------------------------------------
def reference_forward(x_nchw, params):
    x = jnp.transpose(x_nchw, (0, 2, 3, 1))

    def block(x, w_oihw, b):
        w = jnp.transpose(w_oihw, (2, 3, 1, 0))
        y = jax.lax.conv_general_dilated(
            x, w, (1, 1), "SAME", dimension_numbers=("NHWC", "HWIO", "NHWC"))
        y = jax.nn.relu(y + b)
        return jax.lax.reduce_window(y, -jnp.inf, jax.lax.max,
                                     (1, 2, 2, 1), (1, 2, 2, 1), "VALID")

    h = block(x, params["conv1_w"], params["conv1_b"])
    h = block(h, params["conv2_w"], params["conv2_b"])
    B = h.shape[0]
    feat = jnp.transpose(h, (0, 3, 1, 2)).reshape(B, -1)    # torch's (c,h,w) flatten
    return feat @ params["fc_w"].T + params["fc_b"]


if __name__ == "__main__":
    key = jax.random.PRNGKey(0)
    k_x, k_p = jax.random.split(key)

    in_ch, out_ch = 4, 10
    params = init_params(k_p, in_ch, out_ch)
    prep = prepare_params(params)          # one-time weight preprocessing

    # Primary check: B=2 (BT=1 path, 2 grid steps).
    B = 2
    x = jax.random.normal(k_x, (B, in_ch, 28, 28), jnp.float32)
    out = jax.block_until_ready(cnn_forward(x, prep))
    assert out.shape == (B, out_ch) and out.dtype == jnp.float32
    ref = reference_forward(x, params)
    if not jnp.allclose(out, ref, atol=2e-3, rtol=2e-3):
        err = float(jnp.max(jnp.abs(out - ref)))
        raise AssertionError(f"Pallas CNN mismatch (B={B}, max|err|={err})")

    # Secondary check: exercises the batched-M path (BT=4) and batch padding.
    B2 = 6
    x2 = jax.random.normal(jax.random.PRNGKey(1), (B2, in_ch, 28, 28), jnp.float32)
    out2 = jax.block_until_ready(cnn_forward(x2, prep, block_batch=4))
    ref2 = reference_forward(x2, params)
    if not jnp.allclose(out2, ref2, atol=2e-3, rtol=2e-3):
        err = float(jnp.max(jnp.abs(out2 - ref2)))
        raise AssertionError(f"Pallas CNN mismatch (B={B2}, BT=4, max|err|={err})")

    print("KERNEL_OK")
</pallas_src>

<mosaic_0001>
module attributes {stable_mosaic.version = 11 : i64} {
  func.func @_cnn_fused_kernel(%arg0: i32, %arg1: memref<1x784x36xf32, #tpu.memory_space<vmem>>, %arg2: memref<36x128xf32, #tpu.memory_space<vmem>>, %arg3: memref<1x128xf32, #tpu.memory_space<vmem>>, %arg4: memref<128x112xf32, #tpu.memory_space<vmem>>, %arg5: memref<1152x128xf32, #tpu.memory_space<vmem>>, %arg6: memref<1x128xf32, #tpu.memory_space<vmem>>, %arg7: memref<32x32xf32, #tpu.memory_space<vmem>>, %arg8: memref<1x56x128xf32, #tpu.memory_space<vmem>>, %arg9: memref<1x264x128xf32, #tpu.memory_space<vmem>>) attributes {dimension_semantics = [#tpu.dimension_semantics<parallel>], iteration_bounds = array<i64: 2>, scalar_prefetch = 0 : i64, scratch_operands = 1 : i64, tpu.core_type = #tpu.core_type<tc>, window_params = [{transform_indices = @transform_0, window_bounds = array<i64: 1, 784, 36>}, {pipeline_mode = #tpu.pipeline_mode<synchronous>, transform_indices = @transform_1, window_bounds = array<i64: 36, 128>}, {pipeline_mode = #tpu.pipeline_mode<synchronous>, transform_indices = @transform_2, window_bounds = array<i64: 1, 128>}, {pipeline_mode = #tpu.pipeline_mode<synchronous>, transform_indices = @transform_3, window_bounds = array<i64: 128, 112>}, {pipeline_mode = #tpu.pipeline_mode<synchronous>, transform_indices = @transform_4, window_bounds = array<i64: 1152, 128>}, {pipeline_mode = #tpu.pipeline_mode<synchronous>, transform_indices = @transform_5, window_bounds = array<i64: 1, 128>}, {pipeline_mode = #tpu.pipeline_mode<synchronous>, transform_indices = @transform_6, window_bounds = array<i64: 32, 32>}, {transform_indices = @transform_7, window_bounds = array<i64: 1, 56, 128>}]} {
    %cst = arith.constant 0.000000e+00 : f32
    %0 = vector.broadcast %cst : f32 to vector<1x16x128xf32>
    %c0 = arith.constant 0 : index
    %c0_0 = arith.constant 0 : index
    %c0_1 = arith.constant 0 : index
    %1 = vector.load %arg9[%c0, %c0_0, %c0_1] : memref<1x264x128xf32, #tpu.memory_space<vmem>>, vector<1x16x128xf32>
    tpu.vector_store %arg9[%c0, %c0_0, %c0_1], %0 {strides = array<i32>} : memref<1x264x128xf32, #tpu.memory_space<vmem>>, vector<1x16x128xf32>,
    %cst_2 = arith.constant 0.000000e+00 : f32
    %2 = vector.broadcast %cst_2 : f32 to vector<1x24x128xf32>
    %c0_3 = arith.constant 0 : index
    %c240 = arith.constant 240 : index
    %c0_4 = arith.constant 0 : index
    %3 = vector.load %arg9[%c0_3, %c240, %c0_4] : memref<1x264x128xf32, #tpu.memory_space<vmem>>, vector<1x24x128xf32>
    tpu.vector_store %arg9[%c0_3, %c240, %c0_4], %2 {strides = array<i32>} : memref<1x264x128xf32, #tpu.memory_space<vmem>>, vector<1x24x128xf32>,
    %c0_i32 = arith.constant 0 : i32
    %c7_i32 = arith.constant 7 : i32
    %4 = arith.addi %c0_i32, %c7_i32 : i32
    %c1_i32 = arith.constant 1 : i32
    scf.for %arg10 = %c0_i32 to %4 step %c1_i32  : i32 {
      %c112_i32 = arith.constant 112 : i32
      %6 = arith.muli %arg10, %c112_i32 : i32
      %7 = tpu.assume_multiple %6, 16 : i32
      %c0_10 = arith.constant 0 : index
      %8 = arith.index_cast %7 : i32 to index
      %c0_11 = arith.constant 0 : index
      %9 = vector.load %arg1[%c0_10, %8, %c0_11] : memref<1x784x36xf32, #tpu.memory_space<vmem>>, vector<1x112x36xf32>
      %10 = vector.shape_cast %9 : vector<1x112x36xf32> to vector<112x36xf32>
      %c0_12 = arith.constant 0 : index
      %c0_13 = arith.constant 0 : index
      %11 = vector.load %arg2[%c0_12, %c0_13] : memref<36x128xf32, #tpu.memory_space<vmem>>, vector<36x128xf32>
      %cst_14 = arith.constant dense<0.000000e+00> : vector<112x128xf32>
      %12 = tpu.matmul %10, %11, %cst_14 {dimension_numbers = #tpu.dot_dimension_numbers<[1], [0], [0], [1], [0, 0, 1, 1], [], []>} : vector<112x36xf32>, vector<36x128xf32>, vector<112x128xf32> -> vector<112x128xf32>
      %c0_15 = arith.constant 0 : index
      %c0_16 = arith.constant 0 : index
      %13 = vector.load %arg3[%c0_15, %c0_16] : memref<1x128xf32, #tpu.memory_space<vmem>>, vector<1x128xf32>
      %14 = vector.broadcast %13 : vector<1x128xf32> to vector<112x128xf32>
      %15 = arith.addf %12, %14 : vector<112x128xf32>
      %cst_17 = arith.constant 0.000000e+00 : f32
      %16 = vector.broadcast %cst_17 : f32 to vector<112x128xf32>
      %17 = arith.maximumf %15, %16 : vector<112x128xf32>
      %c2_i32 = arith.constant 2 : i32
      %18 = arith.muli %c2_i32, %arg10 : i32
      %c1_i32_18 = arith.constant 1 : i32
      %19 = arith.addi %18, %c1_i32_18 : i32
      %c16_i32 = arith.constant 16 : i32
      %20 = arith.muli %19, %c16_i32 : i32
      %21 = tpu.assume_multiple %20, 16 : i32
      %c0_19 = arith.constant 0 : index
      %c0_20 = arith.constant 0 : index
      %22 = vector.load %arg4[%c0_19, %c0_20] : memref<128x112xf32, #tpu.memory_space<vmem>>, vector<128x112xf32>
      %cst_21 = arith.constant dense<0.000000e+00> : vector<128x128xf32>
      %23 = tpu.matmul %22, %17, %cst_21 {dimension_numbers = #tpu.dot_dimension_numbers<[1], [0], [0], [1], [0, 0, 1, 1], [], []>} : vector<128x112xf32>, vector<112x128xf32>, vector<128x128xf32> -> vector<128x128xf32>
      %24 = vector.shape_cast %23 : vector<128x128xf32> to vector<4x32x128xf32>
      %cst_22 = arith.constant dense<0xFF800000> : vector<32x128xf32>
      %25 = vector.multi_reduction <maximumf>, %24, %cst_22 [0] : vector<4x32x128xf32> to vector<32x128xf32>
      %c0_23 = arith.constant 0 : index
      %26 = arith.index_cast %21 : i32 to index
      %c0_24 = arith.constant 0 : index
      %27 = vector.load %arg9[%c0_23, %26, %c0_24] : memref<1x264x128xf32, #tpu.memory_space<vmem>>, vector<1x32x128xf32>
      %28 = vector.shape_cast %27 : vector<1x32x128xf32> to vector<32x128xf32>
      %29 = vector.shape_cast %25 : vector<32x128xf32> to vector<1x32x128xf32>
      tpu.vector_store %arg9[%c0_23, %26, %c0_24], %29 {strides = array<i32>} : memref<1x264x128xf32, #tpu.memory_space<vmem>>, vector<1x32x128xf32>,
    }
    %c7_i32_5 = arith.constant 7 : i32
    %c0_i32_6 = arith.constant 0 : i32
    %c7_i32_7 = arith.constant 7 : i32
    %5 = arith.addi %c0_i32_6, %c7_i32_7 : i32
    %c1_i32_8 = arith.constant 1 : i32
    scf.for %arg10 = %c0_i32_6 to %5 step %c1_i32_8  : i32 {
      %c32_i32 = arith.constant 32 : i32
      %6 = arith.muli %arg10, %c32_i32 : i32
      %c0_i32_10 = arith.constant 0 : i32
      %7 = arith.addi %6, %c0_i32_10 : i32
      %8 = tpu.assume_multiple %7, 16 : i32
      %c0_11 = arith.constant 0 : index
      %9 = arith.index_cast %8 : i32 to index
      %c0_12 = arith.constant 0 : index
      %10 = vector.load %arg9[%c0_11, %9, %c0_12] : memref<1x264x128xf32, #tpu.memory_space<vmem>>, vector<1x40x128xf32>
      %11 = vector.shape_cast %10 : vector<1x40x128xf32> to vector<40x128xf32>
      %12 = vector.extract_strided_slice %11 {offsets = [0, 0], sizes = [32, 128], strides = [1, 1]} : vector<40x128xf32> to vector<32x128xf32>
      %13 = vector.extract_strided_slice %11 {offsets = [1, 0], sizes = [32, 128], strides = [1, 1]} : vector<40x128xf32> to vector<32x128xf32>
      %14 = vector.extract_strided_slice %11 {offsets = [2, 0], sizes = [32, 128], strides = [1, 1]} : vector<40x128xf32> to vector<32x128xf32>
      %c16_i32 = arith.constant 16 : i32
      %15 = arith.addi %6, %c16_i32 : i32
      %16 = tpu.assume_multiple %15, 16 : i32
      %c0_13 = arith.constant 0 : index
      %17 = arith.index_cast %16 : i32 to index
      %c0_14 = arith.constant 0 : index
      %18 = vector.load %arg9[%c0_13, %17, %c0_14] : memref<1x264x128xf32, #tpu.memory_space<vmem>>, vector<1x40x128xf32>
      %19 = vector.shape_cast %18 : vector<1x40x128xf32> to vector<40x128xf32>
      %20 = vector.extract_strided_slice %19 {offsets = [0, 0], sizes = [32, 128], strides = [1, 1]} : vector<40x128xf32> to vector<32x128xf32>
      %21 = vector.extract_strided_slice %19 {offsets = [1, 0], sizes = [32, 128], strides = [1, 1]} : vector<40x128xf32> to vector<32x128xf32>
      %22 = vector.extract_strided_slice %19 {offsets = [2, 0], sizes = [32, 128], strides = [1, 1]} : vector<40x128xf32> to vector<32x128xf32>
      %c32_i32_15 = arith.constant 32 : i32
      %23 = arith.addi %6, %c32_i32_15 : i32
      %24 = tpu.assume_multiple %23, 16 : i32
      %c0_16 = arith.constant 0 : index
      %25 = arith.index_cast %24 : i32 to index
      %c0_17 = arith.constant 0 : index
      %26 = vector.load %arg9[%c0_16, %25, %c0_17] : memref<1x264x128xf32, #tpu.memory_space<vmem>>, vector<1x40x128xf32>
      %27 = vector.shape_cast %26 : vector<1x40x128xf32> to vector<40x128xf32>
      %28 = vector.extract_strided_slice %27 {offsets = [0, 0], sizes = [32, 128], strides = [1, 1]} : vector<40x128xf32> to vector<32x128xf32>
      %29 = vector.extract_strided_slice %27 {offsets = [1, 0], sizes = [32, 128], strides = [1, 1]} : vector<40x128xf32> to vector<32x128xf32>
      %30 = vector.extract_strided_slice %27 {offsets = [2, 0], sizes = [32, 128], strides = [1, 1]} : vector<40x128xf32> to vector<32x128xf32>
      %31 = tpu.concatenate %12, %13, %14, %20, %21, %22, %28, %29, %30 in 1 : vector<32x128xf32>, vector<32x128xf32>, vector<32x128xf32>, vector<32x128xf32>, vector<32x128xf32>, vector<32x128xf32>, vector<32x128xf32>, vector<32x128xf32>, vector<32x128xf32> -> vector<32x1152xf32>
      %c0_18 = arith.constant 0 : index
      %c0_19 = arith.constant 0 : index
      %32 = vector.load %arg5[%c0_18, %c0_19] : memref<1152x128xf32, #tpu.memory_space<vmem>>, vector<1152x128xf32>
      %cst_20 = arith.constant dense<0.000000e+00> : vector<32x128xf32>
      %33 = tpu.matmul %31, %32, %cst_20 {dimension_numbers = #tpu.dot_dimension_numbers<[1], [0], [0], [1], [0, 0, 1, 1], [], []>} : vector<32x1152xf32>, vector<1152x128xf32>, vector<32x128xf32> -> vector<32x128xf32>
      %c0_21 = arith.constant 0 : index
      %c0_22 = arith.constant 0 : index
      %34 = vector.load %arg6[%c0_21, %c0_22] : memref<1x128xf32, #tpu.memory_space<vmem>>, vector<1x128xf32>
      %35 = vector.broadcast %34 : vector<1x128xf32> to vector<32x128xf32>
      %36 = arith.addf %33, %35 : vector<32x128xf32>
      %cst_23 = arith.constant 0.000000e+00 : f32
      %37 = vector.broadcast %cst_23 : f32 to vector<32x128xf32>
      %38 = arith.maximumf %36, %37 : vector<32x128xf32>
      %c8_i32 = arith.constant 8 : i32
      %39 = arith.muli %arg10, %c8_i32 : i32
      %40 = tpu.assume_multiple %39, 8 : i32
      %c0_24 = arith.constant 0 : index
      %c0_25 = arith.constant 0 : index
      %41 = vector.load %arg7[%c0_24, %c0_25] : memref<32x32xf32, #tpu.memory_space<vmem>>, vector<32x32xf32>
      %cst_26 = arith.constant dense<0.000000e+00> : vector<32x128xf32>
      %42 = tpu.matmul %41, %38, %cst_26 {dimension_numbers = #tpu.dot_dimension_numbers<[1], [0], [0], [1], [0, 0, 1, 1], [], []>} : vector<32x32xf32>, vector<32x128xf32>, vector<32x128xf32> -> vector<32x128xf32>
      %43 = vector.shape_cast %42 : vector<32x128xf32> to vector<4x8x128xf32>
      %cst_27 = arith.constant dense<0xFF800000> : vector<8x128xf32>
      %44 = vector.multi_reduction <maximumf>, %43, %cst_27 [0] : vector<4x8x128xf32> to vector<8x128xf32>
      %c0_28 = arith.constant 0 : index
      %45 = arith.index_cast %40 : i32 to index
      %c0_29 = arith.constant 0 : index
      %46 = vector.load %arg8[%c0_28, %45, %c0_29] : memref<1x56x128xf32, #tpu.memory_space<vmem>>, vector<1x8x128xf32>
      %47 = vector.shape_cast %46 : vector<1x8x128xf32> to vector<8x128xf32>
      %48 = vector.shape_cast %44 : vector<8x128xf32> to vector<1x8x128xf32>
      tpu.vector_store %arg8[%c0_28, %45, %c0_29], %48 {strides = array<i32>} : memref<1x56x128xf32, #tpu.memory_space<vmem>>, vector<1x8x128xf32>,
    }
    %c7_i32_9 = arith.constant 7 : i32
    return
  }
  func.func @transform_0(%arg0: i32) -> (i32, i32, i32) {
    %c0_i32 = arith.constant 0 : i32
    %c0_i32_0 = arith.constant 0 : i32
    %c0_i32_1 = arith.constant 0 : i32
    return %arg0, %c0_i32, %c0_i32_0 : i32, i32, i32
  }
  func.func @transform_1(%arg0: i32) -> (i32, i32) {
    %c0_i32 = arith.constant 0 : i32
    %c0_i32_0 = arith.constant 0 : i32
    %c0_i32_1 = arith.constant 0 : i32
    return %c0_i32, %c0_i32_0 : i32, i32
  }
  func.func @transform_2(%arg0: i32) -> (i32, i32) {
    %c0_i32 = arith.constant 0 : i32
    %c0_i32_0 = arith.constant 0 : i32
    %c0_i32_1 = arith.constant 0 : i32
    return %c0_i32, %c0_i32_0 : i32, i32
  }
  func.func @transform_3(%arg0: i32) -> (i32, i32) {
    %c0_i32 = arith.constant 0 : i32
    %c0_i32_0 = arith.constant 0 : i32
    %c0_i32_1 = arith.constant 0 : i32
    return %c0_i32, %c0_i32_0 : i32, i32
  }
  func.func @transform_4(%arg0: i32) -> (i32, i32) {
    %c0_i32 = arith.constant 0 : i32
    %c0_i32_0 = arith.constant 0 : i32
    %c0_i32_1 = arith.constant 0 : i32
    return %c0_i32, %c0_i32_0 : i32, i32
  }
  func.func @transform_5(%arg0: i32) -> (i32, i32) {
    %c0_i32 = arith.constant 0 : i32
    %c0_i32_0 = arith.constant 0 : i32
    %c0_i32_1 = arith.constant 0 : i32
    return %c0_i32, %c0_i32_0 : i32, i32
  }
  func.func @transform_6(%arg0: i32) -> (i32, i32) {
    %c0_i32 = arith.constant 0 : i32
    %c0_i32_0 = arith.constant 0 : i32
    %c0_i32_1 = arith.constant 0 : i32
    return %c0_i32, %c0_i32_0 : i32, i32
  }
  func.func @transform_7(%arg0: i32) -> (i32, i32, i32) {
    %c0_i32 = arith.constant 0 : i32
    %c0_i32_0 = arith.constant 0 : i32
    %c0_i32_1 = arith.constant 0 : i32
    return %arg0, %c0_i32, %c0_i32_0 : i32, i32, i32
  }
}

</mosaic_0001>

<llo_original>
// kernel: tpu_custom_call.1
$region0: #{tpu_custom_call.1}
  #allocation0 [shape = 'u32[]', space=smem, size = 0x4, offset = 0x4, fixed_abs, tag = 'smem constant byte address 0x4 - core index']
  #allocation1 [shape = 'u32[72,128]{1,0:T(1,128)}', space=vmem, size = 0x9000, scoped, tag = 'internal scratch']
  #allocation2 [shape = 'f32[1,264,128]{2,1,0:T(8,128)}', space=vmem, size = 0x21000, scoped, tag = 'scratch operand']
  %s0 = inlined_call_operand.vmem [shape: f32[2,784,36], index: 0, kind: input, shape index: {}]
  %s1 = inlined_call_operand.vmem [shape: f32[36,128], index: 1, kind: input, shape index: {}]
  %s2 = inlined_call_operand.vmem [shape: f32[1,128], index: 2, kind: input, shape index: {}]
  %s3 = inlined_call_operand.vmem [shape: f32[128,112], index: 3, kind: input, shape index: {}]
  %s4 = inlined_call_operand.vmem [shape: f32[1152,128], index: 4, kind: input, shape index: {}]
  %s5 = inlined_call_operand.vmem [shape: f32[1,128], index: 5, kind: input, shape index: {}]
  %s6 = inlined_call_operand.vmem [shape: f32[32,32], index: 6, kind: input, shape index: {}]
  %s7 = inlined_call_operand.hbm [shape: f32[2,56,128], index: 7, kind: output, shape index: {}]
  %s8 = sld [smem:[#allocation0]]
  $region75: #{tpu_custom_call.1} parent=0
    _
  %s10 = ssub.s32 1, %s8
  %s11 = scalar_select 0, %s10, %s8
  $region1: #{tpu_custom_call.1} parent=0
    #allocation3 [shape = 'u8[57344]{0}', space=vmem, size = 0xe000, scoped, tag = 'output window, operand 0']
    #allocation4 [shape = 's32[2]{0}', space=sflag, size = 0x8, scoped, tag = 'scoped memory for tpu_custom_call.1']
    %12 = vsyncpa [#allocation4], 0
    %s13 = scalar_lea.sflag [#allocation4], 1
    %14 = vsyncpa %s13, 0
    loop: start=0, step=1, limit=4
    $region2: #{tpu_custom_call.1} parent=1 // loop_pre_header
      _
    $region3: #{tpu_custom_call.1} parent=1 // loop_header
      %s16 = sphi 0, %s20
      %p17 = scmp.ge.s32.totalorder %s16, 4
      %s26 = sphi 0, %s28
      %s29 = sphi 0, %s26
      %s30 = sphi 0, %s29
      %s46 = sphi 0, %s30
      %s50 = sphi 0, %s50
      %s52 = sphi 0, %s50
      %s53 = sphi 0, %s52
      %s67 = sphi 0, %s53
      %s71 = sphi 0, %s71
      %s73 = sphi 0, %s71
      %s74 = sphi 0, %s73
      %s88 = sphi 0, %s74
      %s92 = sphi 0, %s92
      %s94 = sphi 0, %s92
      %s95 = sphi 0, %s94
      %s109 = sphi 0, %s95
      %s113 = sphi 0, %s113
      %s115 = sphi 0, %s113
      %s116 = sphi 0, %s115
      %s130 = sphi 0, %s116
      %s134 = sphi 0, %s134
      %s136 = sphi 0, %s134
      %s137 = sphi 0, %s136
      %s151 = sphi 0, %s137
      %s155 = sphi 0, %s155
      %s157 = sphi 0, %s155
      %s158 = sphi 0, %s157
      %s172 = sphi 0, %s158
      %s178 = sphi 0, %s180
      %s181 = sphi 0, %s178
      %s182 = sphi 0, %s181
      %s198 = sphi 0, %s182
    $region4: #{tpu_custom_call.1} parent=1 // loop_header_branch
      %19 = sbr.rel (%p17) target = $region8
    $region5: #{tpu_custom_call.1} parent=1 // loop_body
      %s21 = ssub.s32 %s16, 1
      %s22 = ssub.s32 %s16, 2
      %s23 = sadd.s32 %s16, 1
      %s24 = ssub.s32 %s16, %s23
      %p25 = scmp.eq.s32.totalorder %s24, 0
      %s27 = sadd.s32 %s26, 1
      %s28 = scalar_select %p25, %s26, %s27
      %p31 = pneg %p25
      %p32 = scmp.eq.s32.totalorder %s16, 1
      %p33 = por %p31, %p32
      %p34 = scmp.ne.s32.totalorder %s26, %s29
      %p35 = scmp.eq.s32.totalorder %s16, 0
      %p36 = por %p34, %p35
      %p37 = scmp.ne.s32.totalorder %s26, %s29
      %p38 = scmp.eq.s32.totalorder %s21, 1
      %p39 = por %p37, %p38
      %p40 = scmp.ne.s32.totalorder %s29, %s30
      %p41 = scmp.eq.s32.totalorder %s21, 0
      %p42 = por %p40, %p41
      %p43 = scmp.ne.s32.totalorder %s29, %s30
      %p44 = scmp.eq.s32.totalorder %s22, 1
      %p45 = por %p43, %p44
      %p47 = scmp.ne.s32.totalorder %s30, %s46
      %p48 = scmp.eq.s32.totalorder %s22, 0
      %p49 = por %p47, %p48
      %s51 = sadd.s32 %s50, 1
      %p54 = scmp.eq.s32.totalorder %s16, 1
      %p55 = scmp.ne.s32.totalorder %s50, %s52
      %p56 = scmp.eq.s32.totalorder %s16, 0
      %p57 = por %p55, %p56
      %p58 = scmp.ne.s32.totalorder %s50, %s52
      %p59 = scmp.eq.s32.totalorder %s21, 1
      %p60 = por %p58, %p59
      %p61 = scmp.ne.s32.totalorder %s52, %s53
      %p62 = scmp.eq.s32.totalorder %s21, 0
      %p63 = por %p61, %p62
      %p64 = scmp.ne.s32.totalorder %s52, %s53
      %p65 = scmp.eq.s32.totalorder %s22, 1
      %p66 = por %p64, %p65
      %p68 = scmp.ne.s32.totalorder %s53, %s67
      %p69 = scmp.eq.s32.totalorder %s22, 0
      %p70 = por %p68, %p69
      %s72 = sadd.s32 %s71, 1
      %p75 = scmp.eq.s32.totalorder %s16, 1
      %p76 = scmp.ne.s32.totalorder %s71, %s73
      %p77 = scmp.eq.s32.totalorder %s16, 0
      %p78 = por %p76, %p77
      %p79 = scmp.ne.s32.totalorder %s71, %s73
      %p80 = scmp.eq.s32.totalorder %s21, 1
      %p81 = por %p79, %p80
      %p82 = scmp.ne.s32.totalorder %s73, %s74
      %p83 = scmp.eq.s32.totalorder %s21, 0
      %p84 = por %p82, %p83
      %p85 = scmp.ne.s32.totalorder %s73, %s74
      %p86 = scmp.eq.s32.totalorder %s22, 1
      %p87 = por %p85, %p86
      %p89 = scmp.ne.s32.totalorder %s74, %s88
      %p90 = scmp.eq.s32.totalorder %s22, 0
      %p91 = por %p89, %p90
      %s93 = sadd.s32 %s92, 1
      %p96 = scmp.eq.s32.totalorder %s16, 1
      %p97 = scmp.ne.s32.totalorder %s92, %s94
      %p98 = scmp.eq.s32.totalorder %s16, 0
      %p99 = por %p97, %p98
      %p100 = scmp.ne.s32.totalorder %s92, %s94
      %p101 = scmp.eq.s32.totalorder %s21, 1
      %p102 = por %p100, %p101
      %p103 = scmp.ne.s32.totalorder %s94, %s95
      %p104 = scmp.eq.s32.totalorder %s21, 0
      %p105 = por %p103, %p104
      %p106 = scmp.ne.s32.totalorder %s94, %s95
      %p107 = scmp.eq.s32.totalorder %s22, 1
      %p108 = por %p106, %p107
      %p110 = scmp.ne.s32.totalorder %s95, %s109
      %p111 = scmp.eq.s32.totalorder %s22, 0
      %p112 = por %p110, %p111
      %s114 = sadd.s32 %s113, 1
      %p117 = scmp.eq.s32.totalorder %s16, 1
      %p118 = scmp.ne.s32.totalorder %s113, %s115
      %p119 = scmp.eq.s32.totalorder %s16, 0
      %p120 = por %p118, %p119
      %p121 = scmp.ne.s32.totalorder %s113, %s115
      %p122 = scmp.eq.s32.totalorder %s21, 1
      %p123 = por %p121, %p122
      %p124 = scmp.ne.s32.totalorder %s115, %s116
      %p125 = scmp.eq.s32.totalorder %s21, 0
      %p126 = por %p124, %p125
      %p127 = scmp.ne.s32.totalorder %s115, %s116
      %p128 = scmp.eq.s32.totalorder %s22, 1
      %p129 = por %p127, %p128
      %p131 = scmp.ne.s32.totalorder %s116, %s130
      %p132 = scmp.eq.s32.totalorder %s22, 0
      %p133 = por %p131, %p132
      %s135 = sadd.s32 %s134, 1
      %p138 = scmp.eq.s32.totalorder %s16, 1
      %p139 = scmp.ne.s32.totalorder %s134, %s136
      %p140 = scmp.eq.s32.totalorder %s16, 0
      %p141 = por %p139, %p140
      %p142 = scmp.ne.s32.totalorder %s134, %s136
      %p143 = scmp.eq.s32.totalorder %s21, 1
      %p144 = por %p142, %p143
      %p145 = scmp.ne.s32.totalorder %s136, %s137
      %p146 = scmp.eq.s32.totalorder %s21, 0
      %p147 = por %p145, %p146
      %p148 = scmp.ne.s32.totalorder %s136, %s137
      %p149 = scmp.eq.s32.totalorder %s22, 1
      %p150 = por %p148, %p149
      %p152 = scmp.ne.s32.totalorder %s137, %s151
      %p153 = scmp.eq.s32.totalorder %s22, 0
      %p154 = por %p152, %p153
      %s156 = sadd.s32 %s155, 1
      %p159 = scmp.eq.s32.totalorder %s16, 1
      %p160 = scmp.ne.s32.totalorder %s155, %s157
      %p161 = scmp.eq.s32.totalorder %s16, 0
      %p162 = por %p160, %p161
      %p163 = scmp.ne.s32.totalorder %s155, %s157
      %p164 = scmp.eq.s32.totalorder %s21, 1
      %p165 = por %p163, %p164
      %p166 = scmp.ne.s32.totalorder %s157, %s158
      %p167 = scmp.eq.s32.totalorder %s21, 0
      %p168 = por %p166, %p167
      %p169 = scmp.ne.s32.totalorder %s157, %s158
      %p170 = scmp.eq.s32.totalorder %s22, 1
      %p171 = por %p169, %p170
      %p173 = scmp.ne.s32.totalorder %s158, %s172
      %p174 = scmp.eq.s32.totalorder %s22, 0
      %p175 = por %p173, %p174
      %s176 = ssub.s32 %s16, %s23
      %p177 = scmp.eq.s32.totalorder %s176, 0
      %s179 = sadd.s32 %s178, 1
      %s180 = scalar_select %p177, %s178, %s179
      %p183 = pneg %p177
      %p184 = scmp.eq.s32.totalorder %s16, 1
      %p185 = por %p183, %p184
      %p186 = scmp.ne.s32.totalorder %s178, %s181
      %p187 = scmp.eq.s32.totalorder %s16, 0
      %p188 = por %p186, %p187
      %p189 = scmp.ne.s32.totalorder %s178, %s181
      %p190 = scmp.eq.s32.totalorder %s21, 1
      %p191 = por %p189, %p190
      %p192 = scmp.ne.s32.totalorder %s181, %s182
      %p193 = scmp.eq.s32.totalorder %s21, 0
      %p194 = por %p192, %p193
      %p195 = scmp.ne.s32.totalorder %s181, %s182
      %p196 = scmp.eq.s32.totalorder %s22, 1
      %p197 = por %p195, %p196
      %p199 = scmp.ne.s32.totalorder %s182, %s198
      %p200 = scmp.eq.s32.totalorder %s22, 0
      %p201 = por %p199, %p200
      %p202 = scmp.le.s32.totalorder 1, %s16
      %p203 = scmp.lt.s32.totalorder %s16, 3
      %p204 = pnand %p202, %p203
      %p205 = pneg %p204
      // Predicated region
      $region9: #{tpu_custom_call.1} parent=5 // pred_check
        _
      $region10: #{tpu_custom_call.1} parent=5 // pred_check_branch
        %207 = sbr.rel (%p204) target = $region12
      $region11: #{tpu_custom_call.1} parent=5 // pred_region
        %s208 = ssub.s32 %s16, 1
        // Predicated region
        $region13: #{tpu_custom_call.1} parent=11 // pred_check
          %p209 = pneg %p63
        $region14: #{tpu_custom_call.1} parent=11 // pred_check_branch
          %211 = sbr.rel (%p209) target = $region16
        $region15: #{tpu_custom_call.1} parent=11 // pred_region
          _
        $region16: #{tpu_custom_call.1} parent=11 // pred_fallthru
          _
        // Predicated region
        $region17: #{tpu_custom_call.1} parent=11 // pred_check
          %p212 = pneg %p84
        $region18: #{tpu_custom_call.1} parent=11 // pred_check_branch
          %214 = sbr.rel (%p212) target = $region20
        $region19: #{tpu_custom_call.1} parent=11 // pred_region
          _
        $region20: #{tpu_custom_call.1} parent=11 // pred_fallthru
          _
        // Predicated region
        $region21: #{tpu_custom_call.1} parent=11 // pred_check
          %p215 = pneg %p105
        $region22: #{tpu_custom_call.1} parent=11 // pred_check_branch
          %217 = sbr.rel (%p215) target = $region24
        $region23: #{tpu_custom_call.1} parent=11 // pred_region
          _
        $region24: #{tpu_custom_call.1} parent=11 // pred_fallthru
          _
        // Predicated region
        $region25: #{tpu_custom_call.1} parent=11 // pred_check
          %p218 = pneg %p126
        $region26: #{tpu_custom_call.1} parent=11 // pred_check_branch
          %220 = sbr.rel (%p218) target = $region28
        $region27: #{tpu_custom_call.1} parent=11 // pred_region
          _
        $region28: #{tpu_custom_call.1} parent=11 // pred_fallthru
          _
        // Predicated region
        $region29: #{tpu_custom_call.1} parent=11 // pred_check
          %p221 = pneg %p147
        $region30: #{tpu_custom_call.1} parent=11 // pred_check_branch
          %223 = sbr.rel (%p221) target = $region32
        $region31: #{tpu_custom_call.1} parent=11 // pred_region
          _
        $region32: #{tpu_custom_call.1} parent=11 // pred_fallthru
          _
        // Predicated region
        $region33: #{tpu_custom_call.1} parent=11 // pred_check
          %p224 = pneg %p168
        $region34: #{tpu_custom_call.1} parent=11 // pred_check_branch
          %226 = sbr.rel (%p224) target = $region36
        $region35: #{tpu_custom_call.1} parent=11 // pred_region
          _
        $region36: #{tpu_custom_call.1} parent=11 // pred_fallthru
          _
      $region12: #{tpu_custom_call.1} parent=5 // pred_fallthru
        _
      %p227 = scmp.lt.s32.totalorder %s16, 2
      // Predicated region
      $region37: #{tpu_custom_call.1} parent=5 // pred_check
        %p228 = pneg %p227
      $region38: #{tpu_custom_call.1} parent=5 // pred_check_branch
        %230 = sbr.rel (%p228) target = $region40
      $region39: #{tpu_custom_call.1} parent=5 // pred_region
        // Predicated region
        $region41: #{tpu_custom_call.1} parent=39 // pred_check
          %p231 = pneg %p36
        $region42: #{tpu_custom_call.1} parent=39 // pred_check_branch
          %233 = sbr.rel (%p231) target = $region44
        $region43: #{tpu_custom_call.1} parent=39 // pred_region
          %p234 = scmp.lt.s32.totalorder %s16, 1
          %s235 = scalar_select %p234, %s16, 1
          %s236 = smul.addr %s235, 98
          %s237 = smul.addr %s236, 8
          %s238 = scalar_lea.vmem %s0, %s237
        $region44: #{tpu_custom_call.1} parent=39 // pred_fallthru
          _
      $region40: #{tpu_custom_call.1} parent=5 // pred_fallthru
        _
      %p239 = scmp.le.s32.totalorder 1, %s16
      %p240 = scmp.lt.s32.totalorder %s16, 3
      %p241 = pnand %p239, %p240
      %p242 = pneg %p241
      // Predicated region
      $region45: #{tpu_custom_call.1} parent=5 // pred_check
        _
      $region46: #{tpu_custom_call.1} parent=5 // pred_check_branch
        %244 = sbr.rel (%p241) target = $region48
      $region47: #{tpu_custom_call.1} parent=5 // pred_region
        %s245 = ssub.s32 %s16, 1
        %p246 = scmp.lt.s32.totalorder %s21, 1
        %s247 = scalar_select %p246, %s21, 1
        %s248 = smul.addr %s247, 98
        %s249 = smul.addr %s248, 8
        %s250 = scalar_lea.vmem %s0, %s249
        %p251 = pneg %p42
        %p252 = pneg %p39
        %p253 = pneg %p63
        %p254 = pneg %p60
        %p255 = pneg %p84
        %p256 = pneg %p81
        %p257 = pneg %p105
        %p258 = pneg %p102
        %p259 = pneg %p126
        %p260 = pneg %p123
        %p261 = pneg %p147
        %p262 = pneg %p144
        %p263 = pneg %p168
        %p264 = pneg %p165
        %p265 = pneg %p194
        %p266 = pneg %p191
        %s267 = sand.u32 %s181, 1
        %s268 = scalar_lea.sflag [#allocation4], %s267
        %s269 = sand.u32 %s181, 1
        %s270 = smul.addr %s269, 56
        %s271 = scalar_lea.vmem [#allocation3], %s270
        %p272 = scmp.lt.s32.totalorder %s21, 1
        %s273 = scalar_select %p272, %s21, 1
        %s274 = smul.addr %s273, 98
        %s275 = smul.addr %s274, 8
        %s276 = scalar_lea.vmem %s0, %s275
        %277 = vst [vmem:[#allocation2] sm:$0xff] 0.0
        %278 = vst [vmem:[#allocation2 + $0x8] sm:$0xff] 0.0
        %279 = vst [vmem:[#allocation2 + $0xf0] sm:$0xff] 0.0
        %280 = vst [vmem:[#allocation2 + $0xf8] sm:$0xff] 0.0
        %281 = vst [vmem:[#allocation2 + $0x100] sm:$0xff] 0.0
        loop: start=0, step=1, limit=7
        $region49: #{tpu_custom_call.1} parent=47 // loop_pre_header
          _
        $region50: #{tpu_custom_call.1} parent=47 // loop_header
          %s283 = sphi 0, %s287
          %p284 = scmp.ge.s32.totalorder %s283, 7
        $region51: #{tpu_custom_call.1} parent=47 // loop_header_branch
          %286 = sbr.rel (%p284) target = $region55
        $region52: #{tpu_custom_call.1} parent=47 // loop_body
          %s288 = smul.u32 %s283, 112
          %s289 = scalar_lea.vmem %s276, %s288
          %v290 = vld [vmem:[%s289] sm:$0xff]
          %v291 = vld [vmem:[%s289 + $0x8] sm:$0xff]
          %v292 = vld [vmem:[%s289 + $0x10] sm:$0xff]
          %v293 = vld [vmem:[%s289 + $0x18] sm:$0xff]
          %v294 = vld [vmem:[%s289 + $0x20] sm:$0xff]
          %v295 = vld [vmem:[%s289 + $0x28] sm:$0xff]
          %v296 = vld [vmem:[%s289 + $0x30] sm:$0xff]
          %v297 = vld [vmem:[%s289 + $0x38] sm:$0xff]
          %v298 = vld [vmem:[%s289 + $0x40] sm:$0xff]
          %v299 = vld [vmem:[%s289 + $0x48] sm:$0xff]
          %v300 = vld [vmem:[%s289 + $0x50] sm:$0xff]
          %v301 = vld [vmem:[%s289 + $0x58] sm:$0xff]
          %v302 = vld [vmem:[%s289 + $0x60] sm:$0xff]
          %v303 = vld [vmem:[%s289 + $0x68] sm:$0xff]
          %v304 = vld [vmem:[%s1] sm:$0xff]
          %v305 = vld [vmem:[%s1 + $0x8] sm:$0xff]
          %v306 = vld [vmem:[%s1 + $0x10] sm:$0xff]
          %v307 = vld [vmem:[%s1 + $0x18] sm:$0xff]
          %v308 = vld [vmem:[%s1 + $0x20] sm:$0xf]
          %v309 = vld [vmem:[%s2] sm:$0x1]
          %v311 = vperm.slane %v309, 0
          %vm313 = vcmask 293888
          %v315 = vsel %vm313, %v290, 0
          %v318 = vsel %vm313, %v291, 0
          %v321 = vsel %vm313, %v292, 0
          %v324 = vsel %vm313, %v293, 0
          %v327 = vsel %vm313, %v294, 0
          %v330 = vsel %vm313, %v295, 0
          %v333 = vsel %vm313, %v296, 0
          %v336 = vsel %vm313, %v297, 0
          %v339 = vsel %vm313, %v298, 0
          %v342 = vsel %vm313, %v299, 0
          %v345 = vsel %vm313, %v300, 0
          %v348 = vsel %vm313, %v301, 0
          %v351 = vsel %vm313, %v302, 0
          %v354 = vsel %vm313, %v303, 0
          %vm356 = vcmask 1043456
          %v358 = vsel %vm356, %v308, 0
          %360 = vmatpush.msra.mxu0 0.0
          %361 = vmatpush.msra.mxu0 0.0
          %362 = vmatpush.msra.mxu0 0.0
          %363 = vmatpush.msra.mxu0 0.0
          %364 = vmatpush.msra.mxu0 0.0
          %365 = vmatpush.msra.mxu0 0.0
          %366 = vmatpush.msra.mxu0 0.0
          %367 = vmatpush.msra.mxu0 0.0
          %368 = vmatpush.msra.mxu0 0.0
          %369 = vmatpush.msra.mxu0 0.0
          %370 = vmatpush.msra.mxu0 0.0
          %371 = vmatpush.msra.mxu0 %v358
          %372 = vmatpush.msra.mxu0 %v307
          %373 = vmatpush.msra.mxu0 %v306
          %374 = vmatpush.msra.mxu0 %v305
          %375 = vmatpush.msra.mxu0 %v304
          %376 = vmatmul.f32.gmra.mxu0 %v315
          %v377 = vpop.f32.mrf.mxu0
          %v378 = vadd.f32 %v311, %v377
          %379 = vmatmul.f32.gmra.mxu0 %v318
          %v380 = vpop.f32.mrf.mxu0
          %v381 = vadd.f32 %v311, %v380
          %382 = vmatmul.f32.gmra.mxu0 %v321
          %v383 = vpop.f32.mrf.mxu0
          %v384 = vadd.f32 %v311, %v383
          %385 = vmatmul.f32.gmra.mxu0 %v324
          %v386 = vpop.f32.mrf.mxu0
          %v387 = vadd.f32 %v311, %v386
          %388 = vmatmul.f32.gmra.mxu0 %v327
          %v389 = vpop.f32.mrf.mxu0
          %v390 = vadd.f32 %v311, %v389
          %391 = vmatmul.f32.gmra.mxu0 %v330
          %v392 = vpop.f32.mrf.mxu0
          %v393 = vadd.f32 %v311, %v392
          %394 = vmatmul.f32.gmra.mxu0 %v333
          %v395 = vpop.f32.mrf.mxu0
          %v396 = vadd.f32 %v311, %v395
          %397 = vmatmul.f32.gmra.mxu0 %v336
          %v398 = vpop.f32.mrf.mxu0
          %v399 = vadd.f32 %v311, %v398
          %400 = vmatmul.f32.gmra.mxu0 %v339
          %v401 = vpop.f32.mrf.mxu0
          %v402 = vadd.f32 %v311, %v401
          %403 = vmatmul.f32.gmra.mxu0 %v342
          %v404 = vpop.f32.mrf.mxu0
          %v405 = vadd.f32 %v311, %v404
          %406 = vmatmul.f32.gmra.mxu0 %v345
          %v407 = vpop.f32.mrf.mxu0
          %v408 = vadd.f32 %v311, %v407
          %409 = vmatmul.f32.gmra.mxu0 %v348
          %v410 = vpop.f32.mrf.mxu0
          %v411 = vadd.f32 %v311, %v410
          %412 = vmatmul.f32.gmra.mxu0 %v351
          %v413 = vpop.f32.mrf.mxu0
          %v414 = vadd.f32 %v311, %v413
          %415 = vmatmul.f32.gmra.mxu0 %v354
          %v416 = vpop.f32.mrf.mxu0
          %v417 = vadd.f32 %v311, %v416
          %418 = vdwg.mxu0
          %v419 = vmax.f32 %v378, 0.0
          %v420 = vmax.f32 %v381, 0.0
          %v421 = vmax.f32 %v384, 0.0
          %v422 = vmax.f32 %v387, 0.0
          %v423 = vmax.f32 %v390, 0.0
          %v424 = vmax.f32 %v393, 0.0
          %v425 = vmax.f32 %v396, 0.0
          %v426 = vmax.f32 %v399, 0.0
          %v427 = vmax.f32 %v402, 0.0
          %v428 = vmax.f32 %v405, 0.0
          %v429 = vmax.f32 %v408, 0.0
          %v430 = vmax.f32 %v411, 0.0
          %v431 = vmax.f32 %v414, 0.0
          %v432 = vmax.f32 %v417, 0.0
          %s433 = smul.u32 %s283, 2
          %s434 = sadd.s32 %s433, 1
          %s435 = smul.u32 %s434, 16
          %v436 = vld [vmem:[%s3] sm:$0xff]
          %v437 = vld [vmem:[%s3 + $0x8] sm:$0xff]
          %v438 = vld [vmem:[%s3 + $0x10] sm:$0xff]
          %v439 = vld [vmem:[%s3 + $0x18] sm:$0xff]
          %v440 = vld [vmem:[%s3 + $0x20] sm:$0xff]
          %v441 = vld [vmem:[%s3 + $0x28] sm:$0xff]
          %v442 = vld [vmem:[%s3 + $0x30] sm:$0xff]
          %v443 = vld [vmem:[%s3 + $0x38] sm:$0xff]
          %v444 = vld [vmem:[%s3 + $0x40] sm:$0xff]
          %v445 = vld [vmem:[%s3 + $0x48] sm:$0xff]
          %v446 = vld [vmem:[%s3 + $0x50] sm:$0xff]
          %v447 = vld [vmem:[%s3 + $0x58] sm:$0xff]
          %v448 = vld [vmem:[%s3 + $0x60] sm:$0xff]
          %v449 = vld [vmem:[%s3 + $0x68] sm:$0xff]
          %v450 = vld [vmem:[%s3 + $0x70] sm:$0xff]
          %v451 = vld [vmem:[%s3 + $0x78] sm:$0xff]
          %vm452 = vcmask 916480
          %v454 = vsel %vm452, %v436, 0
          %v457 = vsel %vm452, %v437, 0
          %v460 = vsel %vm452, %v438, 0
          %v463 = vsel %vm452, %v439, 0
          %v466 = vsel %vm452, %v440, 0
          %v469 = vsel %vm452, %v441, 0
          %v472 = vsel %vm452, %v442, 0
          %v475 = vsel %vm452, %v443, 0
          %v478 = vsel %vm452, %v444, 0
          %v481 = vsel %vm452, %v445, 0
          %v484 = vsel %vm452, %v446, 0
          %v487 = vsel %vm452, %v447, 0
          %v490 = vsel %vm452, %v448, 0
          %v493 = vsel %vm452, %v449, 0
          %v496 = vsel %vm452, %v450, 0
          %v499 = vsel %vm452, %v451, 0
          %501 = vmatpush.msra.mxu0 0.0
          %502 = vmatpush.msra.mxu0 0.0
          %503 = vmatpush.msra.mxu0 %v432
          %504 = vmatpush.msra.mxu0 %v431
          %505 = vmatpush.msra.mxu0 %v430
          %506 = vmatpush.msra.mxu0 %v429
          %507 = vmatpush.msra.mxu0 %v428
          %508 = vmatpush.msra.mxu0 %v427
          %509 = vmatpush.msra.mxu0 %v426
          %510 = vmatpush.msra.mxu0 %v425
          %511 = vmatpush.msra.mxu0 %v424
          %512 = vmatpush.msra.mxu0 %v423
          %513 = vmatpush.msra.mxu0 %v422
          %514 = vmatpush.msra.mxu0 %v421
          %515 = vmatpush.msra.mxu0 %v420
          %516 = vmatpush.msra.mxu0 %v419
          %517 = vmatmul.f32.gmra.mxu0 %v454
          %v518 = vpop.f32.mrf.mxu0
          %v519 = vadd.f32 0.0, %v518
          %520 = vmatmul.f32.gmra.mxu0 %v457
          %v521 = vpop.f32.mrf.mxu0
          %v522 = vadd.f32 0.0, %v521
          %523 = vmatmul.f32.gmra.mxu0 %v460
          %v524 = vpop.f32.mrf.mxu0
          %v525 = vadd.f32 0.0, %v524
          %526 = vmatmul.f32.gmra.mxu0 %v463
          %v527 = vpop.f32.mrf.mxu0
          %v528 = vadd.f32 0.0, %v527
          %529 = vmatmul.f32.gmra.mxu0 %v466
          %v530 = vpop.f32.mrf.mxu0
          %v531 = vadd.f32 0.0, %v530
          %532 = vmatmul.f32.gmra.mxu0 %v469
          %v533 = vpop.f32.mrf.mxu0
          %v534 = vadd.f32 0.0, %v533
          %535 = vmatmul.f32.gmra.mxu0 %v472
          %v536 = vpop.f32.mrf.mxu0
          %v537 = vadd.f32 0.0, %v536
          %538 = vmatmul.f32.gmra.mxu0 %v475
          %v539 = vpop.f32.mrf.mxu0
          %v540 = vadd.f32 0.0, %v539
          %541 = vmatmul.f32.gmra.mxu0 %v478
          %v542 = vpop.f32.mrf.mxu0
          %v543 = vadd.f32 0.0, %v542
          %544 = vmatmul.f32.gmra.mxu0 %v481
          %v545 = vpop.f32.mrf.mxu0
          %v546 = vadd.f32 0.0, %v545
          %547 = vmatmul.f32.gmra.mxu0 %v484
          %v548 = vpop.f32.mrf.mxu0
          %v549 = vadd.f32 0.0, %v548
          %550 = vmatmul.f32.gmra.mxu0 %v487
          %v551 = vpop.f32.mrf.mxu0
          %v552 = vadd.f32 0.0, %v551
          %553 = vmatmul.f32.gmra.mxu0 %v490
          %v554 = vpop.f32.mrf.mxu0
          %v555 = vadd.f32 0.0, %v554
          %556 = vmatmul.f32.gmra.mxu0 %v493
          %v557 = vpop.f32.mrf.mxu0
          %v558 = vadd.f32 0.0, %v557
          %559 = vmatmul.f32.gmra.mxu0 %v496
          %v560 = vpop.f32.mrf.mxu0
          %v561 = vadd.f32 0.0, %v560
          %562 = vmatmul.f32.gmra.mxu0 %v499
          %v563 = vpop.f32.mrf.mxu0
          %v564 = vadd.f32 0.0, %v563
          %565 = vdwg.mxu0
          %v566 = vmax.f32 %v519, %v531
          %v567 = vmax.f32 %v566, %v543
          %v568 = vmax.f32 %v567, %v555
          %v569 = vmax.f32 %v522, %v534
          %v570 = vmax.f32 %v569, %v546
          %v571 = vmax.f32 %v570, %v558
          %v572 = vmax.f32 %v525, %v537
          %v573 = vmax.f32 %v572, %v549
          %v574 = vmax.f32 %v573, %v561
          %v575 = vmax.f32 %v528, %v540
          %v576 = vmax.f32 %v575, %v552
          %v577 = vmax.f32 %v576, %v564
          %s578 = scalar_lea.vmem [#allocation2], %s435
          %579 = vst [vmem:[%s578] sm:$0xff] %v568
          %580 = vst [vmem:[%s578 + $0x8] sm:$0xff] %v571
          %581 = vst [vmem:[%s578 + $0x10] sm:$0xff] %v574
          %582 = vst [vmem:[%s578 + $0x18] sm:$0xff] %v577
        $region53: #{tpu_custom_call.1} parent=47 // loop_footer
          %s287 = sadd.s32 1, %s283
        $region54: #{tpu_custom_call.1} parent=47 // loop_footer_branch
          %282 = sbr.rel target = $region50
        $region55: #{tpu_custom_call.1} parent=47 // loop_exit
          _
        loop: start=0, step=1, limit=7
        $region56: #{tpu_custom_call.1} parent=47 // loop_pre_header
          _
        $region57: #{tpu_custom_call.1} parent=47 // loop_header
          %s584 = sphi 0, %s588
          %p585 = scmp.ge.s32.totalorder %s584, 7
        $region58: #{tpu_custom_call.1} parent=47 // loop_header_branch
          %587 = sbr.rel (%p585) target = $region62
        $region59: #{tpu_custom_call.1} parent=47 // loop_body
          %s589 = smul.u32 %s584, 32
          %s590 = scalar_lea.vmem [#allocation2], %s589
          %v591 = vld [vmem:[%s590] sm:$0xff]
          %v592 = vld [vmem:[%s590 + $0x8] sm:$0xff]
          %v593 = vld [vmem:[%s590 + $0x10] sm:$0xff]
          %v594 = vld [vmem:[%s590 + $0x18] sm:$0xff]
          %v595 = vld [vmem:[%s590 + $0x20] sm:$0xff]
          %s596 = sadd.s32 %s589, 16
          %s597 = scalar_lea.vmem [#allocation2], %s596
          %v598 = vld [vmem:[%s597] sm:$0xff]
          %v599 = vld [vmem:[%s597 + $0x8] sm:$0xff]
          %v600 = vld [vmem:[%s597 + $0x10] sm:$0xff]
          %v601 = vld [vmem:[%s597 + $0x18] sm:$0xff]
          %v602 = vld [vmem:[%s597 + $0x20] sm:$0xff]
          %s603 = sadd.s32 %s589, 32
          %s604 = scalar_lea.vmem [#allocation2], %s603
          %v605 = vld [vmem:[%s604] sm:$0xff]
          %v606 = vld [vmem:[%s604 + $0x8] sm:$0xff]
          %v607 = vld [vmem:[%s604 + $0x10] sm:$0xff]
          %v608 = vld [vmem:[%s604 + $0x18] sm:$0xff]
          %v609 = vld [vmem:[%s604 + $0x20] sm:$0xff]
          %vm615 = vcmask 1046528
          %v616 = vrot.slane %v591, 1
          %v617 = vrot.slane %v592, 1
          %v618 = vsel %vm615, %v616, %v617
          %v619 = vrot.slane %v593, 1
          %v620 = vsel %vm615, %v617, %v619
          %v621 = vrot.slane %v594, 1
          %v622 = vsel %vm615, %v619, %v621
          %v623 = vrot.slane %v595, 1
          %v624 = vsel %vm615, %v621, %v623
          %vm629 = vcmask 1045504
          %v630 = vrot.slane %v591, 2
          %v631 = vrot.slane %v592, 2
          %v632 = vsel %vm629, %v630, %v631
          %v633 = vrot.slane %v593, 2
          %v634 = vsel %vm629, %v631, %v633
          %v635 = vrot.slane %v594, 2
          %v636 = vsel %vm629, %v633, %v635
          %v637 = vrot.slane %v595, 2
          %v638 = vsel %vm629, %v635, %v637
          %v648 = vrot.slane %v598, 1
          %v649 = vrot.slane %v599, 1
          %v650 = vsel %vm615, %v648, %v649
          %v651 = vrot.slane %v600, 1
          %v652 = vsel %vm615, %v649, %v651
          %v653 = vrot.slane %v601, 1
          %v654 = vsel %vm615, %v651, %v653
          %v655 = vrot.slane %v602, 1
          %v656 = vsel %vm615, %v653, %v655
          %v661 = vrot.slane %v598, 2
          %v662 = vrot.slane %v599, 2
          %v663 = vsel %vm629, %v661, %v662
          %v664 = vrot.slane %v600, 2
          %v665 = vsel %vm629, %v662, %v664
          %v666 = vrot.slane %v601, 2
          %v667 = vsel %vm629, %v664, %v666
          %v668 = vrot.slane %v602, 2
          %v669 = vsel %vm629, %v666, %v668
          %v679 = vrot.slane %v605, 1
          %v680 = vrot.slane %v606, 1
          %v681 = vsel %vm615, %v679, %v680
          %v682 = vrot.slane %v607, 1
          %v683 = vsel %vm615, %v680, %v682
          %v684 = vrot.slane %v608, 1
          %v685 = vsel %vm615, %v682, %v684
          %v686 = vrot.slane %v609, 1
          %v687 = vsel %vm615, %v684, %v686
          %v692 = vrot.slane %v605, 2
          %v693 = vrot.slane %v606, 2
          %v694 = vsel %vm629, %v692, %v693
          %v695 = vrot.slane %v607, 2
          %v696 = vsel %vm629, %v693, %v695
          %v697 = vrot.slane %v608, 2
          %v698 = vsel %vm629, %v695, %v697
          %v699 = vrot.slane %v609, 2
          %v700 = vsel %vm629, %v697, %v699
          %v705 = vld [vmem:[%s4] sm:$0xff]
          %v706 = vld [vmem:[%s4 + $0x8] sm:$0xff]
          %v707 = vld [vmem:[%s4 + $0x10] sm:$0xff]
          %v708 = vld [vmem:[%s4 + $0x18] sm:$0xff]
          %v709 = vld [vmem:[%s4 + $0x20] sm:$0xff]
          %v710 = vld [vmem:[%s4 + $0x28] sm:$0xff]
          %v711 = vld [vmem:[%s4 + $0x30] sm:$0xff]
          %v712 = vld [vmem:[%s4 + $0x38] sm:$0xff]
          %v713 = vld [vmem:[%s4 + $0x40] sm:$0xff]
          %v714 = vld [vmem:[%s4 + $0x48] sm:$0xff]
          %v715 = vld [vmem:[%s4 + $0x50] sm:$0xff]
          %v716 = vld [vmem:[%s4 + $0x58] sm:$0xff]
          %v717 = vld [vmem:[%s4 + $0x60] sm:$0xff]
          %v718 = vld [vmem:[%s4 + $0x68] sm:$0xff]
          %v719 = vld [vmem:[%s4 + $0x70] sm:$0xff]
          %v720 = vld [vmem:[%s4 + $0x78] sm:$0xff]
          %v721 = vld [vmem:[%s4 + $0x80] sm:$0xff]
          %v722 = vld [vmem:[%s4 + $0x88] sm:$0xff]
          %v723 = vld [vmem:[%s4 + $0x90] sm:$0xff]
          %v724 = vld [vmem:[%s4 + $0x98] sm:$0xff]
          %v725 = vld [vmem:[%s4 + $0xa0] sm:$0xff]
          %v726 = vld [vmem:[%s4 + $0xa8] sm:$0xff]
          %v727 = vld [vmem:[%s4 + $0xb0] sm:$0xff]
          %v728 = vld [vmem:[%s4 + $0xb8] sm:$0xff]
          %v729 = vld [vmem:[%s4 + $0xc0] sm:$0xff]
          %v730 = vld [vmem:[%s4 + $0xc8] sm:$0xff]
          %v731 = vld [vmem:[%s4 + $0xd0] sm:$0xff]
          %v732 = vld [vmem:[%s4 + $0xd8] sm:$0xff]
          %v733 = vld [vmem:[%s4 + $0xe0] sm:$0xff]
          %v734 = vld [vmem:[%s4 + $0xe8] sm:$0xff]
          %v735 = vld [vmem:[%s4 + $0xf0] sm:$0xff]
          %v736 = vld [vmem:[%s4 + $0xf8] sm:$0xff]
          %v737 = vld [vmem:[%s4 + $0x100] sm:$0xff]
          %v738 = vld [vmem:[%s4 + $0x108] sm:$0xff]
          %v739 = vld [vmem:[%s4 + $0x110] sm:$0xff]
          %v740 = vld [vmem:[%s4 + $0x118] sm:$0xff]
          %v741 = vld [vmem:[%s4 + $0x120] sm:$0xff]
          %v742 = vld [vmem:[%s4 + $0x128] sm:$0xff]
          %v743 = vld [vmem:[%s4 + $0x130] sm:$0xff]
          %v744 = vld [vmem:[%s4 + $0x138] sm:$0xff]
          %v745 = vld [vmem:[%s4 + $0x140] sm:$0xff]
          %v746 = vld [vmem:[%s4 + $0x148] sm:$0xff]
          %v747 = vld [vmem:[%s4 + $0x150] sm:$0xff]
          %v748 = vld [vmem:[%s4 + $0x158] sm:$0xff]
          %v749 = vld [vmem:[%s4 + $0x160] sm:$0xff]
          %v750 = vld [vmem:[%s4 + $0x168] sm:$0xff]
          %v751 = vld [vmem:[%s4 + $0x170] sm:$0xff]
          %v752 = vld [vmem:[%s4 + $0x178] sm:$0xff]
          %v753 = vld [vmem:[%s4 + $0x180] sm:$0xff]
          %v754 = vld [vmem:[%s4 + $0x188] sm:$0xff]
          %v755 = vld [vmem:[%s4 + $0x190] sm:$0xff]
          %v756 = vld [vmem:[%s4 + $0x198] sm:$0xff]
          %v757 = vld [vmem:[%s4 + $0x1a0] sm:$0xff]
          %v758 = vld [vmem:[%s4 + $0x1a8] sm:$0xff]
          %v759 = vld [vmem:[%s4 + $0x1b0] sm:$0xff]
          %v760 = vld [vmem:[%s4 + $0x1b8] sm:$0xff]
          %v761 = vld [vmem:[%s4 + $0x1c0] sm:$0xff]
          %v762 = vld [vmem:[%s4 + $0x1c8] sm:$0xff]
          %v763 = vld [vmem:[%s4 + $0x1d0] sm:$0xff]
          %v764 = vld [vmem:[%s4 + $0x1d8] sm:$0xff]
          %v765 = vld [vmem:[%s4 + $0x1e0] sm:$0xff]
          %v766 = vld [vmem:[%s4 + $0x1e8] sm:$0xff]
          %v767 = vld [vmem:[%s4 + $0x1f0] sm:$0xff]
          %v768 = vld [vmem:[%s4 + $0x1f8] sm:$0xff]
          %v769 = vld [vmem:[%s4 + $0x200] sm:$0xff]
          %v770 = vld [vmem:[%s4 + $0x208] sm:$0xff]
          %v771 = vld [vmem:[%s4 + $0x210] sm:$0xff]
          %v772 = vld [vmem:[%s4 + $0x218] sm:$0xff]
          %v773 = vld [vmem:[%s4 + $0x220] sm:$0xff]
          %v774 = vld [vmem:[%s4 + $0x228] sm:$0xff]
          %v775 = vld [vmem:[%s4 + $0x230] sm:$0xff]
          %v776 = vld [vmem:[%s4 + $0x238] sm:$0xff]
          %v777 = vld [vmem:[%s4 + $0x240] sm:$0xff]
          %v778 = vld [vmem:[%s4 + $0x248] sm:$0xff]
          %v779 = vld [vmem:[%s4 + $0x250] sm:$0xff]
          %v780 = vld [vmem:[%s4 + $0x258] sm:$0xff]
          %v781 = vld [vmem:[%s4 + $0x260] sm:$0xff]
          %v782 = vld [vmem:[%s4 + $0x268] sm:$0xff]
          %v783 = vld [vmem:[%s4 + $0x270] sm:$0xff]
          %v784 = vld [vmem:[%s4 + $0x278] sm:$0xff]
          %v785 = vld [vmem:[%s4 + $0x280] sm:$0xff]
          %v786 = vld [vmem:[%s4 + $0x288] sm:$0xff]
          %v787 = vld [vmem:[%s4 + $0x290] sm:$0xff]
          %v788 = vld [vmem:[%s4 + $0x298] sm:$0xff]
          %v789 = vld [vmem:[%s4 + $0x2a0] sm:$0xff]
          %v790 = vld [vmem:[%s4 + $0x2a8] sm:$0xff]
          %v791 = vld [vmem:[%s4 + $0x2b0] sm:$0xff]
          %v792 = vld [vmem:[%s4 + $0x2b8] sm:$0xff]
          %v793 = vld [vmem:[%s4 + $0x2c0] sm:$0xff]
          %v794 = vld [vmem:[%s4 + $0x2c8] sm:$0xff]
          %v795 = vld [vmem:[%s4 + $0x2d0] sm:$0xff]
          %v796 = vld [vmem:[%s4 + $0x2d8] sm:$0xff]
          %v797 = vld [vmem:[%s4 + $0x2e0] sm:$0xff]
          %v798 = vld [vmem:[%s4 + $0x2e8] sm:$0xff]
          %v799 = vld [vmem:[%s4 + $0x2f0] sm:$0xff]
          %v800 = vld [vmem:[%s4 + $0x2f8] sm:$0xff]
          %v801 = vld [vmem:[%s4 + $0x300] sm:$0xff]
          %v802 = vld [vmem:[%s4 + $0x308] sm:$0xff]
          %v803 = vld [vmem:[%s4 + $0x310] sm:$0xff]
          %v804 = vld [vmem:[%s4 + $0x318] sm:$0xff]
          %v805 = vld [vmem:[%s4 + $0x320] sm:$0xff]
          %v806 = vld [vmem:[%s4 + $0x328] sm:$0xff]
          %v807 = vld [vmem:[%s4 + $0x330] sm:$0xff]
          %v808 = vld [vmem:[%s4 + $0x338] sm:$0xff]
          %v809 = vld [vmem:[%s4 + $0x340] sm:$0xff]
          %v810 = vld [vmem:[%s4 + $0x348] sm:$0xff]
          %v811 = vld [vmem:[%s4 + $0x350] sm:$0xff]
          %v812 = vld [vmem:[%s4 + $0x358] sm:$0xff]
          %v813 = vld [vmem:[%s4 + $0x360] sm:$0xff]
          %v814 = vld [vmem:[%s4 + $0x368] sm:$0xff]
          %v815 = vld [vmem:[%s4 + $0x370] sm:$0xff]
          %v816 = vld [vmem:[%s4 + $0x378] sm:$0xff]
          %v817 = vld [vmem:[%s4 + $0x380] sm:$0xff]
          %v818 = vld [vmem:[%s4 + $0x388] sm:$0xff]
          %v819 = vld [vmem:[%s4 + $0x390] sm:$0xff]
          %v820 = vld [vmem:[%s4 + $0x398] sm:$0xff]
          %v821 = vld [vmem:[%s4 + $0x3a0] sm:$0xff]
          %v822 = vld [vmem:[%s4 + $0x3a8] sm:$0xff]
          %v823 = vld [vmem:[%s4 + $0x3b0] sm:$0xff]
          %v824 = vld [vmem:[%s4 + $0x3b8] sm:$0xff]
          %v825 = vld [vmem:[%s4 + $0x3c0] sm:$0xff]
          %v826 = vld [vmem:[%s4 + $0x3c8] sm:$0xff]
          %v827 = vld [vmem:[%s4 + $0x3d0] sm:$0xff]
          %v828 = vld [vmem:[%s4 + $0x3d8] sm:$0xff]
          %v829 = vld [vmem:[%s4 + $0x3e0] sm:$0xff]
          %v830 = vld [vmem:[%s4 + $0x3e8] sm:$0xff]
          %v831 = vld [vmem:[%s4 + $0x3f0] sm:$0xff]
          %v832 = vld [vmem:[%s4 + $0x3f8] sm:$0xff]
          %v833 = vld [vmem:[%s4 + $0x400] sm:$0xff]
          %v834 = vld [vmem:[%s4 + $0x408] sm:$0xff]
          %v835 = vld [vmem:[%s4 + $0x410] sm:$0xff]
          %v836 = vld [vmem:[%s4 + $0x418] sm:$0xff]
          %v837 = vld [vmem:[%s4 + $0x420] sm:$0xff]
          %v838 = vld [vmem:[%s4 + $0x428] sm:$0xff]
          %v839 = vld [vmem:[%s4 + $0x430] sm:$0xff]
          %v840 = vld [vmem:[%s4 + $0x438] sm:$0xff]
          %v841 = vld [vmem:[%s4 + $0x440] sm:$0xff]
          %v842 = vld [vmem:[%s4 + $0x448] sm:$0xff]
          %v843 = vld [vmem:[%s4 + $0x450] sm:$0xff]
          %v844 = vld [vmem:[%s4 + $0x458] sm:$0xff]
          %v845 = vld [vmem:[%s4 + $0x460] sm:$0xff]
          %v846 = vld [vmem:[%s4 + $0x468] sm:$0xff]
          %v847 = vld [vmem:[%s4 + $0x470] sm:$0xff]
          %v848 = vld [vmem:[%s4 + $0x478] sm:$0xff]
          %v849 = vld [vmem:[%s5] sm:$0x1]
          %v851 = vperm.slane %v849, 0
          %853 = vmatpush.msra.mxu0 %v720
          %854 = vmatpush.msra.mxu0 %v719
          %855 = vmatpush.msra.mxu0 %v718
          %856 = vmatpush.msra.mxu0 %v717
          %857 = vmatpush.msra.mxu0 %v716
          %858 = vmatpush.msra.mxu0 %v715
          %859 = vmatpush.msra.mxu0 %v714
          %860 = vmatpush.msra.mxu0 %v713
          %861 = vmatpush.msra.mxu0 %v712
          %862 = vmatpush.msra.mxu0 %v711
          %863 = vmatpush.msra.mxu0 %v710
          %864 = vmatpush.msra.mxu0 %v709
          %865 = vmatpush.msra.mxu0 %v708
          %866 = vmatpush.msra.mxu0 %v707
          %867 = vmatpush.msra.mxu0 %v706
          %868 = vmatpush.msra.mxu0 %v705
          %869 = vmatmul.f32.gmra.mxu0 %v591
          %v870 = vpop.f32.mrf.mxu0
          %v871 = vadd.f32 %v851, %v870
          %872 = vmatmul.f32.gmra.mxu0 %v592
          %v873 = vpop.f32.mrf.mxu0
          %v874 = vadd.f32 %v851, %v873
          %875 = vmatmul.f32.gmra.mxu0 %v593
          %v876 = vpop.f32.mrf.mxu0
          %v877 = vadd.f32 %v851, %v876
          %878 = vmatmul.f32.gmra.mxu0 %v594
          %v879 = vpop.f32.mrf.mxu0
          %v880 = vadd.f32 %v851, %v879
          %881 = vdwg.mxu0
          %882 = vmatpush.msra.mxu0 %v736
          %883 = vmatpush.msra.mxu0 %v735
          %884 = vmatpush.msra.mxu0 %v734
          %885 = vmatpush.msra.mxu0 %v733
          %886 = vmatpush.msra.mxu0 %v732
          %887 = vmatpush.msra.mxu0 %v731
          %888 = vmatpush.msra.mxu0 %v730
          %889 = vmatpush.msra.mxu0 %v729
          %890 = vmatpush.msra.mxu0 %v728
          %891 = vmatpush.msra.mxu0 %v727
          %892 = vmatpush.msra.mxu0 %v726
          %893 = vmatpush.msra.mxu0 %v725
          %894 = vmatpush.msra.mxu0 %v724
          %895 = vmatpush.msra.mxu0 %v723
          %896 = vmatpush.msra.mxu0 %v722
          %897 = vmatpush.msra.mxu0 %v721
          %898 = vmatmul.f32.gmra.mxu0 %v618
          %v899 = vpop.f32.mrf.mxu0
          %v900 = vadd.f32 %v871, %v899
          %901 = vmatmul.f32.gmra.mxu0 %v620
          %v902 = vpop.f32.mrf.mxu0
          %v903 = vadd.f32 %v874, %v902
          %904 = vmatmul.f32.gmra.mxu0 %v622
          %v905 = vpop.f32.mrf.mxu0
          %v906 = vadd.f32 %v877, %v905
          %907 = vmatmul.f32.gmra.mxu0 %v624
          %v908 = vpop.f32.mrf.mxu0
          %v909 = vadd.f32 %v880, %v908
          %910 = vdwg.mxu0
          %911 = vmatpush.msra.mxu0 %v752
          %912 = vmatpush.msra.mxu0 %v751
          %913 = vmatpush.msra.mxu0 %v750
          %914 = vmatpush.msra.mxu0 %v749
          %915 = vmatpush.msra.mxu0 %v748
          %916 = vmatpush.msra.mxu0 %v747
          %917 = vmatpush.msra.mxu0 %v746
          %918 = vmatpush.msra.mxu0 %v745
          %919 = vmatpush.msra.mxu0 %v744
          %920 = vmatpush.msra.mxu0 %v743
          %921 = vmatpush.msra.mxu0 %v742
          %922 = vmatpush.msra.mxu0 %v741
          %923 = vmatpush.msra.mxu0 %v740
          %924 = vmatpush.msra.mxu0 %v739
          %925 = vmatpush.msra.mxu0 %v738
          %926 = vmatpush.msra.mxu0 %v737
          %927 = vmatmul.f32.gmra.mxu0 %v632
          %v928 = vpop.f32.mrf.mxu0
          %v929 = vadd.f32 %v900, %v928
          %930 = vmatmul.f32.gmra.mxu0 %v634
          %v931 = vpop.f32.mrf.mxu0
          %v932 = vadd.f32 %v903, %v931
          %933 = vmatmul.f32.gmra.mxu0 %v636
          %v934 = vpop.f32.mrf.mxu0
          %v935 = vadd.f32 %v906, %v934
          %936 = vmatmul.f32.gmra.mxu0 %v638
          %v937 = vpop.f32.mrf.mxu0
          %v938 = vadd.f32 %v909, %v937
          %939 = vdwg.mxu0
          %940 = vmatpush.msra.mxu0 %v768
          %941 = vmatpush.msra.mxu0 %v767
          %942 = vmatpush.msra.mxu0 %v766
          %943 = vmatpush.msra.mxu0 %v765
          %944 = vmatpush.msra.mxu0 %v764
          %945 = vmatpush.msra.mxu0 %v763
          %946 = vmatpush.msra.mxu0 %v762
          %947 = vmatpush.msra.mxu0 %v761
          %948 = vmatpush.msra.mxu0 %v760
          %949 = vmatpush.msra.mxu0 %v759
          %950 = vmatpush.msra.mxu0 %v758
          %951 = vmatpush.msra.mxu0 %v757
          %952 = vmatpush.msra.mxu0 %v756
          %953 = vmatpush.msra.mxu0 %v755
          %954 = vmatpush.msra.mxu0 %v754
          %955 = vmatpush.msra.mxu0 %v753
          %956 = vmatmul.f32.gmra.mxu0 %v598
          %v957 = vpop.f32.mrf.mxu0
          %v958 = vadd.f32 %v929, %v957
          %959 = vmatmul.f32.gmra.mxu0 %v599
          %v960 = vpop.f32.mrf.mxu0
          %v961 = vadd.f32 %v932, %v960
          %962 = vmatmul.f32.gmra.mxu0 %v600
          %v963 = vpop.f32.mrf.mxu0
          %v964 = vadd.f32 %v935, %v963
          %965 = vmatmul.f32.gmra.mxu0 %v601
          %v966 = vpop.f32.mrf.mxu0
          %v967 = vadd.f32 %v938, %v966
          %968 = vdwg.mxu0
          %969 = vmatpush.msra.mxu0 %v784
          %970 = vmatpush.msra.mxu0 %v783
          %971 = vmatpush.msra.mxu0 %v782
          %972 = vmatpush.msra.mxu0 %v781
          %973 = vmatpush.msra.mxu0 %v780
          %974 = vmatpush.msra.mxu0 %v779
          %975 = vmatpush.msra.mxu0 %v778
          %976 = vmatpush.msra.mxu0 %v777
          %977 = vmatpush.msra.mxu0 %v776
          %978 = vmatpush.msra.mxu0 %v775
          %979 = vmatpush.msra.mxu0 %v774
          %980 = vmatpush.msra.mxu0 %v773
          %981 = vmatpush.msra.mxu0 %v772
          %982 = vmatpush.msra.mxu0 %v771
          %983 = vmatpush.msra.mxu0 %v770
          %984 = vmatpush.msra.mxu0 %v769
          %985 = vmatmul.f32.gmra.mxu0 %v650
          %v986 = vpop.f32.mrf.mxu0
          %v987 = vadd.f32 %v958, %v986
          %988 = vmatmul.f32.gmra.mxu0 %v652
          %v989 = vpop.f32.mrf.mxu0
          %v990 = vadd.f32 %v961, %v989
          %991 = vmatmul.f32.gmra.mxu0 %v654
          %v992 = vpop.f32.mrf.mxu0
          %v993 = vadd.f32 %v964, %v992
          %994 = vmatmul.f32.gmra.mxu0 %v656
          %v995 = vpop.f32.mrf.mxu0
          %v996 = vadd.f32 %v967, %v995
          %997 = vdwg.mxu0
          %998 = vmatpush.msra.mxu0 %v800
          %999 = vmatpush.msra.mxu0 %v799
          %1000 = vmatpush.msra.mxu0 %v798
          %1001 = vmatpush.msra.mxu0 %v797
          %1002 = vmatpush.msra.mxu0 %v796
          %1003 = vmatpush.msra.mxu0 %v795
          %1004 = vmatpush.msra.mxu0 %v794
          %1005 = vmatpush.msra.mxu0 %v793
          %1006 = vmatpush.msra.mxu0 %v792
          %1007 = vmatpush.msra.mxu0 %v791
          %1008 = vmatpush.msra.mxu0 %v790
          %1009 = vmatpush.msra.mxu0 %v789
          %1010 = vmatpush.msra.mxu0 %v788
          %1011 = vmatpush.msra.mxu0 %v787
          %1012 = vmatpush.msra.mxu0 %v786
          %1013 = vmatpush.msra.mxu0 %v785
          %1014 = vmatmul.f32.gmra.mxu0 %v663
          %v1015 = vpop.f32.mrf.mxu0
          %v1016 = vadd.f32 %v987, %v1015
          %1017 = vmatmul.f32.gmra.mxu0 %v665
          %v1018 = vpop.f32.mrf.mxu0
          %v1019 = vadd.f32 %v990, %v1018
          %1020 = vmatmul.f32.gmra.mxu0 %v667
          %v1021 = vpop.f32.mrf.mxu0
          %v1022 = vadd.f32 %v993, %v1021
          %1023 = vmatmul.f32.gmra.mxu0 %v669
          %v1024 = vpop.f32.mrf.mxu0
          %v1025 = vadd.f32 %v996, %v1024
          %1026 = vdwg.mxu0
          %1027 = vmatpush.msra.mxu0 %v816
          %1028 = vmatpush.msra.mxu0 %v815
          %1029 = vmatpush.msra.mxu0 %v814
          %1030 = vmatpush.msra.mxu0 %v813
          %1031 = vmatpush.msra.mxu0 %v812
          %1032 = vmatpush.msra.mxu0 %v811
          %1033 = vmatpush.msra.mxu0 %v810
          %1034 = vmatpush.msra.mxu0 %v809
          %1035 = vmatpush.msra.mxu0 %v808
          %1036 = vmatpush.msra.mxu0 %v807
          %1037 = vmatpush.msra.mxu0 %v806
          %1038 = vmatpush.msra.mxu0 %v805
          %1039 = vmatpush.msra.mxu0 %v804
          %1040 = vmatpush.msra.mxu0 %v803
          %1041 = vmatpush.msra.mxu0 %v802
          %1042 = vmatpush.msra.mxu0 %v801
          %1043 = vmatmul.f32.gmra.mxu0 %v605
          %v1044 = vpop.f32.mrf.mxu0
          %v1045 = vadd.f32 %v1016, %v1044
          %1046 = vmatmul.f32.gmra.mxu0 %v606
          %v1047 = vpop.f32.mrf.mxu0
          %v1048 = vadd.f32 %v1019, %v1047
          %1049 = vmatmul.f32.gmra.mxu0 %v607
          %v1050 = vpop.f32.mrf.mxu0
          %v1051 = vadd.f32 %v1022, %v1050
          %1052 = vmatmul.f32.gmra.mxu0 %v608
          %v1053 = vpop.f32.mrf.mxu0
          %v1054 = vadd.f32 %v1025, %v1053
          %1055 = vdwg.mxu0
          %1056 = vmatpush.msra.mxu0 %v832
          %1057 = vmatpush.msra.mxu0 %v831
          %1058 = vmatpush.msra.mxu0 %v830
          %1059 = vmatpush.msra.mxu0 %v829
          %1060 = vmatpush.msra.mxu0 %v828
          %1061 = vmatpush.msra.mxu0 %v827
          %1062 = vmatpush.msra.mxu0 %v826
          %1063 = vmatpush.msra.mxu0 %v825
          %1064 = vmatpush.msra.mxu0 %v824
          %1065 = vmatpush.msra.mxu0 %v823
          %1066 = vmatpush.msra.mxu0 %v822
          %1067 = vmatpush.msra.mxu0 %v821
          %1068 = vmatpush.msra.mxu0 %v820
          %1069 = vmatpush.msra.mxu0 %v819
          %1070 = vmatpush.msra.mxu0 %v818
          %1071 = vmatpush.msra.mxu0 %v817
          %1072 = vmatmul.f32.gmra.mxu0 %v681
          %v1073 = vpop.f32.mrf.mxu0
          %v1074 = vadd.f32 %v1045, %v1073
          %1075 = vmatmul.f32.gmra.mxu0 %v683
          %v1076 = vpop.f32.mrf.mxu0
          %v1077 = vadd.f32 %v1048, %v1076
          %1078 = vmatmul.f32.gmra.mxu0 %v685
          %v1079 = vpop.f32.mrf.mxu0
          %v1080 = vadd.f32 %v1051, %v1079
          %1081 = vmatmul.f32.gmra.mxu0 %v687
          %v1082 = vpop.f32.mrf.mxu0
          %v1083 = vadd.f32 %v1054, %v1082
          %1084 = vdwg.mxu0
          %1085 = vmatpush.msra.mxu0 %v848
          %1086 = vmatpush.msra.mxu0 %v847
          %1087 = vmatpush.msra.mxu0 %v846
          %1088 = vmatpush.msra.mxu0 %v845
          %1089 = vmatpush.msra.mxu0 %v844
          %1090 = vmatpush.msra.mxu0 %v843
          %1091 = vmatpush.msra.mxu0 %v842
          %1092 = vmatpush.msra.mxu0 %v841
          %1093 = vmatpush.msra.mxu0 %v840
          %1094 = vmatpush.msra.mxu0 %v839
          %1095 = vmatpush.msra.mxu0 %v838
          %1096 = vmatpush.msra.mxu0 %v837
          %1097 = vmatpush.msra.mxu0 %v836
          %1098 = vmatpush.msra.mxu0 %v835
          %1099 = vmatpush.msra.mxu0 %v834
          %1100 = vmatpush.msra.mxu0 %v833
          %1101 = vmatmul.f32.gmra.mxu0 %v694
          %v1102 = vpop.f32.mrf.mxu0
          %v1103 = vadd.f32 %v1074, %v1102
          %1104 = vmatmul.f32.gmra.mxu0 %v696
          %v1105 = vpop.f32.mrf.mxu0
          %v1106 = vadd.f32 %v1077, %v1105
          %1107 = vmatmul.f32.gmra.mxu0 %v698
          %v1108 = vpop.f32.mrf.mxu0
          %v1109 = vadd.f32 %v1080, %v1108
          %1110 = vmatmul.f32.gmra.mxu0 %v700
          %v1111 = vpop.f32.mrf.mxu0
          %v1112 = vadd.f32 %v1083, %v1111
          %1113 = vdwg.mxu0
          %v1114 = vmax.f32 %v1103, 0.0
          %v1115 = vmax.f32 %v1106, 0.0
          %v1116 = vmax.f32 %v1109, 0.0
          %v1117 = vmax.f32 %v1112, 0.0
          %s1118 = smul.u32 %s584, 8
          %v1119 = vld [vmem:[%s6] sm:$0xff]
          %v1120 = vld [vmem:[%s6 + $0x8] sm:$0xff]
          %v1121 = vld [vmem:[%s6 + $0x10] sm:$0xff]
          %v1122 = vld [vmem:[%s6 + $0x18] sm:$0xff]
          %vm1123 = vcmask 261120
          %v1125 = vsel %vm1123, %v1119, 0
          %v1128 = vsel %vm1123, %v1120, 0
          %v1131 = vsel %vm1123, %v1121, 0
          %v1134 = vsel %vm1123, %v1122, 0
          %1136 = vmatpush.msra.mxu0 0.0
          %1137 = vmatpush.msra.mxu0 0.0
          %1138 = vmatpush.msra.mxu0 0.0
          %1139 = vmatpush.msra.mxu0 0.0
          %1140 = vmatpush.msra.mxu0 0.0
          %1141 = vmatpush.msra.mxu0 0.0
          %1142 = vmatpush.msra.mxu0 0.0
          %1143 = vmatpush.msra.mxu0 0.0
          %1144 = vmatpush.msra.mxu0 0.0
          %1145 = vmatpush.msra.mxu0 0.0
          %1146 = vmatpush.msra.mxu0 0.0
          %1147 = vmatpush.msra.mxu0 0.0
          %1148 = vmatpush.msra.mxu0 %v1117
          %1149 = vmatpush.msra.mxu0 %v1116
          %1150 = vmatpush.msra.mxu0 %v1115
          %1151 = vmatpush.msra.mxu0 %v1114
          %1152 = vmatmul.f32.gmra.mxu0 %v1125
          %v1153 = vpop.f32.mrf.mxu0
          %v1154 = vadd.f32 0.0, %v1153
          %1155 = vmatmul.f32.gmra.mxu0 %v1128
          %v1156 = vpop.f32.mrf.mxu0
          %v1157 = vadd.f32 0.0, %v1156
          %1158 = vmatmul.f32.gmra.mxu0 %v1131
          %v1159 = vpop.f32.mrf.mxu0
          %v1160 = vadd.f32 0.0, %v1159
          %1161 = vmatmul.f32.gmra.mxu0 %v1134
          %v1162 = vpop.f32.mrf.mxu0
          %v1163 = vadd.f32 0.0, %v1162
          %1164 = vdwg.mxu0
          %v1165 = vmax.f32 %v1154, %v1157
          %v1166 = vmax.f32 %v1160, %v1163
          %v1167 = vmax.f32 %v1165, %v1166
          %s1168 = scalar_lea.vmem %s271, %s1118 [#allocation3]
          %1169 = vst [vmem:[%s1168] sm:$0xff] %v1167
        $region60: #{tpu_custom_call.1} parent=47 // loop_footer
          %s588 = sadd.s32 1, %s584
        $region61: #{tpu_custom_call.1} parent=47 // loop_footer_branch
          %583 = sbr.rel target = $region57
        $region62: #{tpu_custom_call.1} parent=47 // loop_exit
          _
        %s1170 = sand.u32 %s181, 1
        %s1171 = scalar_lea.sflag [#allocation4], %s1170
        %s1172 = sand.u32 %s181, 1
        %s1173 = smul.addr %s1172, 56
        %s1174 = scalar_lea.vmem [#allocation3], %s1173
        // Predicated region
        $region63: #{tpu_custom_call.1} parent=47 // pred_check
          %p1175 = pneg %p191
        $region64: #{tpu_custom_call.1} parent=47 // pred_check_branch
          %1177 = sbr.rel (%p1175) target = $region66
        $region65: #{tpu_custom_call.1} parent=47 // pred_region
          %1179 = vsyncadd %s1171, 0
          %s1180 = smul.addr %s21, 7
          %s1181 = smul.addr %s1180, 8
          %s1182 = scalar_lea.hbm %s7, %s1181
          %s1183 = sshll.u32 %s1174, 4
          %s1184 = int_to_ptr.vmem [resolvable:$true] %s1183
          %s1185 = sshll.u32 %s1182, 4
          %s1186 = int_to_ptr.hbm [resolvable:$true] %s1185
          %1191 = dma.vmem_to_hbm [thread:$0]  %s1184, 896, %s1186, %s1171, 128, 128, 8
        $region66: #{tpu_custom_call.1} parent=47 // pred_fallthru
          _
      $region48: #{tpu_custom_call.1} parent=5 // pred_fallthru
        _
      %p1192 = scmp.le.s32.totalorder 2, %s16
      // Predicated region
      $region67: #{tpu_custom_call.1} parent=5 // pred_check
        %p1193 = pneg %p1192
      $region68: #{tpu_custom_call.1} parent=5 // pred_check_branch
        %1195 = sbr.rel (%p1193) target = $region70
      $region69: #{tpu_custom_call.1} parent=5 // pred_region
        %s1196 = ssub.s32 %s16, 2
        // Predicated region
        $region71: #{tpu_custom_call.1} parent=69 // pred_check
          %p1197 = pneg %p197
        $region72: #{tpu_custom_call.1} parent=69 // pred_check_branch
          %1199 = sbr.rel (%p1197) target = $region74
        $region73: #{tpu_custom_call.1} parent=69 // pred_region
          %s1200 = sand.u32 %s182, 1
          %s1201 = scalar_lea.sflag [#allocation4], %s1200
          %s1202 = sand.u32 %s182, 1
          %s1203 = smul.addr %s1202, 56
          %s1204 = scalar_lea.vmem [#allocation3], %s1203
          %1206 = dma.done %s1201, 896
        $region74: #{tpu_custom_call.1} parent=69 // pred_fallthru
          _
      $region70: #{tpu_custom_call.1} parent=5 // pred_fallthru
        _
    $region6: #{tpu_custom_call.1} parent=1 // loop_footer
      %s20 = sadd.s32 1, %s16
    $region7: #{tpu_custom_call.1} parent=1 // loop_footer_branch
      %15 = sbr.rel target = $region3
    $region8: #{tpu_custom_call.1} parent=1 // loop_exit
      _
    %1207 = vsyncpa [#allocation4], 1
    %s1208 = scalar_lea.sflag [#allocation4], 1
    %1209 = vsyncpa %s1208, 1

</llo_original>
